<compile_context>
chip_gen: v5e
topology: v5e:2x2
jax: 0.10.0
libtpu: 0.0.40
codegen_flags: <defaults>
</compile_context>

<pallas_src>
import functools

import jax
import jax.numpy as jnp
from jax import lax
from jax.experimental import pallas as pl
from jax.experimental.pallas import tpu as pltpu

# ----------------------------- small AST config ------------------------------
BATCH = 2
HIDDEN = 32          # config.hidden_size
HEADS = 4
HEAD_DIM = HIDDEN // HEADS
LAYERS = 2           # config.num_hidden_layers -> num_layers = LAYERS + 1 hidden states
MLP = 4 * HIDDEN     # intermediate_size (= 128, already lane-dense)
MEL = 16             # num_mel_bins (frequency)
TFRAMES = 24         # time frames ("max_length")
PATCH = 8            # conv kernel (16x16 in real AST)
FSTRIDE = 4          # frequency stride (10 in real AST)
TSTRIDE = 4          # time stride (10 in real AST)
F_OUT = (MEL - PATCH) // FSTRIDE + 1      # 3
T_OUT = (TFRAMES - PATCH) // TSTRIDE + 1  # 5
NUM_PATCHES = F_OUT * T_OUT               # 15
SEQ = NUM_PATCHES + 2                     # cls + distillation tokens -> 17
SEQ_PAD = ((SEQ + 7) // 8) * 8            # 24, sublane-aligned working length
H_PAD = 128          # lane-dense activation width (real hidden in cols 0..31)
QKV_PAD = 128        # fused QKV width (3*HIDDEN=96 padded lane-dense to 128)
FRAME_LEN = 64       # samples per frame for the simplified feature extractor
LN_EPS = 1e-12       # HF ASTConfig.layer_norm_eps

_SQRT_2_OVER_PI = 0.7978845608028654


def _gelu_tanh(x):
    # tanh-approx GELU; tanh runs on the EUP slot.
    return 0.5 * x * (1.0 + jnp.tanh(_SQRT_2_OVER_PI * (x + 0.044715 * x * x * x)))


# ------------------------- fused encoder-stack kernel -------------------------
def _stack_kernel(x_emb_ref, ln1_ref, wqkv_ref, bqkv_ref, wo_ref, bo_ref,
                  ln2_ref, w1_ref, b1_ref, w2_ref, b2_ref, lnf_ref,
                  hs_ref, fin_ref, x_scr,
                  *, eps, heads, head_dim, hidden, seq_valid):
    """One pre-LN AST/ViT encoder layer per grid step; x carried in VMEM scratch."""
    layer = pl.program_id(1)

    @pl.when(layer == 0)
    def _():
        x_scr[...] = x_emb_ref[0]               # load the embeddings for this batch elem

    x = x_scr[...]                              # (SEQ_PAD, H_PAD); cols >= hidden are 0
    s_pad, h_pad = x.shape
    h = heads * head_dim

    # column mask over the real hidden width (LayerNorm stats use 32 real cols only)
    colmask = (lax.broadcasted_iota(jnp.int32, (s_pad, h_pad), 1) < hidden
               ).astype(jnp.float32)
    inv_n = 1.0 / hidden

    def ln(val, gb):                            # gb: (2, H_PAD) = [gamma; beta], zero-padded
        mean = jnp.sum(val, axis=-1, keepdims=True) * inv_n
        d = (val - mean) * colmask
        var = jnp.sum(d * d, axis=-1, keepdims=True) * inv_n
        # gamma/beta are zero in padded cols -> padded cols stay exactly zero
        return (val - mean) * lax.rsqrt(var + eps) * gb[0:1, :] + gb[1:2, :]

    # --- self-attention block ---
    xn = ln(x, ln1_ref[0])
    qkv = jnp.dot(xn, wqkv_ref[0],
                  preferred_element_type=jnp.float32) + bqkv_ref[0]     # (S_PAD, 128)

    # mask padded key positions (rows >= seq_valid are padding)
    key_ok = lax.broadcasted_iota(jnp.int32, (s_pad, s_pad), 1) < seq_valid

    # per-head attention, accumulated straight into the output projection
    # (ctx_h @ Wo[head rows]) -> no lane-axis concat of heads.
    acc = x + bo_ref[0]                                                 # residual + bias
    for hh in range(heads):                                             # static unroll
        lo = hh * head_dim
        qh = qkv[:, lo:lo + head_dim]            # 1/sqrt(head_dim) folded into Wq at init
        kh = qkv[:, h + lo:h + lo + head_dim]
        vh = qkv[:, 2 * h + lo:2 * h + lo + head_dim]
        s = lax.dot_general(qh, kh, (((1,), (1,)), ((), ())),
                            preferred_element_type=jnp.float32)         # (S_PAD, S_PAD)
        s = jnp.where(key_ok, s, -1e30)
        s = s - jnp.max(s, axis=-1, keepdims=True)
        p = jnp.exp(s)
        p = p / jnp.sum(p, axis=-1, keepdims=True)                      # exact softmax
        ctx = jnp.dot(p, vh, preferred_element_type=jnp.float32)        # (S_PAD, hd)
        acc = acc + jnp.dot(ctx, wo_ref[0, lo:lo + head_dim, :],
                            preferred_element_type=jnp.float32)         # (S_PAD, 128)
    x = acc

    # --- MLP block ---
    xn2 = ln(x, ln2_ref[0])
    hid = jnp.dot(xn2, w1_ref[0],
                  preferred_element_type=jnp.float32) + b1_ref[0]       # (S_PAD, MLP)
    hid = _gelu_tanh(hid)
    x = jnp.dot(hid, w2_ref[0],
                preferred_element_type=jnp.float32) + b2_ref[0] + x     # fc2 + residual

    x_scr[...] = x                               # carry to the next layer step
    hs_ref[0, 0] = x                             # per-layer hidden state (lane-dense store)

    @pl.when(layer == pl.num_programs(1) - 1)
    def _():
        fin_ref[0] = ln(x, lnf_ref[...])         # fused final LayerNorm


def encoder_stack(x_pad, sp):
    """x_pad: (B, SEQ_PAD, H_PAD) zero-padded embeddings.

    Returns (hidden_states (LAYERS, B, SEQ_PAD, H_PAD), final_ln (B, SEQ_PAD, H_PAD)).
    """
    B = x_pad.shape[0]
    kernel = functools.partial(_stack_kernel, eps=LN_EPS, heads=HEADS,
                               head_dim=HEAD_DIM, hidden=HIDDEN, seq_valid=SEQ)

    def wspec(shape):
        # per-layer stacked weight: leading dim selected by the layer grid axis
        return pl.BlockSpec((1,) + shape, lambda b, l: (l,) + (0,) * len(shape))

    return pl.pallas_call(
        kernel,
        out_shape=(
            jax.ShapeDtypeStruct((LAYERS, B, SEQ_PAD, H_PAD), jnp.float32),
            jax.ShapeDtypeStruct((B, SEQ_PAD, H_PAD), jnp.float32),
        ),
        grid=(B, LAYERS),
        in_specs=[
            pl.BlockSpec((1, SEQ_PAD, H_PAD), lambda b, l: (b, 0, 0)),   # embeddings
            wspec((2, H_PAD)),            # ln1 gamma/beta
            wspec((H_PAD, QKV_PAD)),      # fused Wqkv (padded)
            wspec((1, QKV_PAD)),          # fused bqkv
            wspec((HIDDEN, H_PAD)),       # Wo (output cols padded)
            wspec((1, H_PAD)),            # bo
            wspec((2, H_PAD)),            # ln2 gamma/beta
            wspec((H_PAD, MLP)),          # W1 (input rows padded)
            wspec((1, MLP)),              # b1
            wspec((MLP, H_PAD)),          # W2 (output cols padded)
            wspec((1, H_PAD)),            # b2
            pl.BlockSpec((2, H_PAD), lambda b, l: (0, 0)),               # final LN
        ],
        out_specs=(
            pl.BlockSpec((1, 1, SEQ_PAD, H_PAD), lambda b, l: (l, b, 0, 0)),
            pl.BlockSpec((1, SEQ_PAD, H_PAD), lambda b, l: (b, 0, 0)),
        ),
        scratch_shapes=[pltpu.VMEM((SEQ_PAD, H_PAD), jnp.float32)],
        compiler_params=pltpu.CompilerParams(
            dimension_semantics=("parallel", "arbitrary")),
    )(x_pad, sp["ln1"], sp["wqkv"], sp["bqkv"], sp["wo"], sp["bo"],
      sp["ln2"], sp["w1"], sp["b1"], sp["w2"], sp["b2"], sp["lnf"])


# --------------------------------- forward ------------------------------------
def ast_forward(audio, params):
    """Mirrors ASTEncoder.forward: preprocess -> ASTModel -> dict of outputs."""
    B = audio.shape[0]

    # TODO(synk): simplified framed-projection feature extractor (not Kaldi fbank).
    frames = audio.reshape(B, TFRAMES, FRAME_LEN)
    feats = jnp.log1p(jnp.abs(jnp.einsum("btf,fm->btm", frames, params["mel_proj"])))
    feats = (feats - (-4.2677393)) / (2.0 * 4.5689974)        # AST-style normalization
    # (B, T, MEL) -> unsqueeze(1).transpose(2,3) -> NCHW (B, 1, MEL, T)
    spec = jnp.transpose(feats, (0, 2, 1))[:, None, :, :]

    # patch embedding: Conv2d(1, HIDDEN, PATCH, stride) as one conv op, then
    # flatten(2).transpose(1,2) exactly like HF ASTPatchEmbeddings.
    pe = lax.conv_general_dilated(
        spec, params["w_conv"], (FSTRIDE, TSTRIDE), "VALID",
        dimension_numbers=("NCHW", "OIHW", "NCHW"))            # (B, H, F_OUT, T_OUT)
    pe = pe.reshape(B, HIDDEN, NUM_PATCHES).transpose(0, 2, 1) + params["b_patch"]

    cls = jnp.broadcast_to(params["cls_token"], (B, 1, HIDDEN))
    dist = jnp.broadcast_to(params["dist_token"], (B, 1, HIDDEN))
    x = jnp.concatenate([cls, dist, pe], axis=1) + params["pos_embed"]   # (B, SEQ, H)

    # pad to a sublane-aligned, lane-dense (B, SEQ_PAD, 128) slab; padding is zero
    # (attention masks padded keys, LN uses the 32 real columns only).
    x_pad = jnp.pad(x, ((0, 0), (0, SEQ_PAD - SEQ), (0, H_PAD - HIDDEN)))

    hs_all, final_pad = encoder_stack(x_pad, params["stack"])

    hidden_states = [x] + [hs_all[l, :, :SEQ, :HIDDEN] for l in range(LAYERS)]
    seq_out = final_pad[:, :SEQ, :HIDDEN]
    pooled = (seq_out[:, 0] + seq_out[:, 1]) / 2.0             # AST pooling: mean(cls, dist)

    return {
        "last_hidden_state": seq_out,
        "pooler_output": pooled,
        "hidden_states": hidden_states,                        # LAYERS + 1 tensors
    }


# ------------------------------ parameter init --------------------------------
def _pad_to(a, shape):
    return jnp.pad(a, [(0, t - s) for s, t in zip(a.shape, shape)])


def init_params(key):
    keys = iter(jax.random.split(key, 5 + LAYERS * 6))

    def nrm(shape, std=0.02):
        return jax.random.normal(next(keys), shape, jnp.float32) * std

    params = {
        "mel_proj": nrm((FRAME_LEN, MEL), 0.1),
        "w_conv": nrm((HIDDEN, 1, PATCH, PATCH)),   # Conv2d(1, HIDDEN, PATCH) OIHW
        "b_patch": jnp.zeros((HIDDEN,), jnp.float32),
        "cls_token": nrm((1, 1, HIDDEN)),
        "dist_token": nrm((1, 1, HIDDEN)),
        "pos_embed": nrm((1, SEQ, HIDDEN)),
    }

    ones_h = jnp.ones((HIDDEN,), jnp.float32)
    zeros_h = jnp.zeros((HIDDEN,), jnp.float32)
    ln_gb = _pad_to(jnp.stack([ones_h, zeros_h]), (2, H_PAD))
    scale = 1.0 / (HEAD_DIM ** 0.5)

    ln1, wqkv, bqkv, wo, bo, ln2, w1, b1, w2, b2 = ([] for _ in range(10))
    for _ in range(LAYERS):
        wq = nrm((HIDDEN, HIDDEN)) * scale          # 1/sqrt(head_dim) folded into Wq
        wk = nrm((HIDDEN, HIDDEN))
        wv = nrm((HIDDEN, HIDDEN))
        w_o = nrm((HIDDEN, HIDDEN))
        w_1 = nrm((HIDDEN, MLP))
        w_2 = nrm((MLP, HIDDEN))
        ln1.append(ln_gb)
        ln2.append(ln_gb)
        # fused QKV weight, padded lane-dense once at init (not per forward)
        wqkv.append(_pad_to(jnp.concatenate([wq, wk, wv], axis=1), (H_PAD, QKV_PAD)))
        bqkv.append(jnp.zeros((1, QKV_PAD), jnp.float32))
        wo.append(_pad_to(w_o, (HIDDEN, H_PAD)))
        bo.append(jnp.zeros((1, H_PAD), jnp.float32))
        w1.append(_pad_to(w_1, (H_PAD, MLP)))
        b1.append(jnp.zeros((1, MLP), jnp.float32))
        w2.append(_pad_to(w_2, (MLP, H_PAD)))
        b2.append(jnp.zeros((1, H_PAD), jnp.float32))

    params["stack"] = {
        "ln1": jnp.stack(ln1), "wqkv": jnp.stack(wqkv), "bqkv": jnp.stack(bqkv),
        "wo": jnp.stack(wo), "bo": jnp.stack(bo), "ln2": jnp.stack(ln2),
        "w1": jnp.stack(w1), "b1": jnp.stack(b1), "w2": jnp.stack(w2),
        "b2": jnp.stack(b2),
        "lnf": ln_gb,
    }
    return params


# ----------------------------------- main --------------------------------------
if __name__ == "__main__":
    key = jax.random.PRNGKey(0)
    pkey, akey = jax.random.split(key)
    params = init_params(pkey)

    audio = jax.random.normal(akey, (BATCH, TFRAMES * FRAME_LEN), jnp.float32)

    ast_forward_jit = jax.jit(ast_forward)
    out = ast_forward_jit(audio, params)
    out = jax.block_until_ready(out)

    assert out["last_hidden_state"].shape == (BATCH, SEQ, HIDDEN)
    assert out["pooler_output"].shape == (BATCH, HIDDEN)
    assert len(out["hidden_states"]) == LAYERS + 1
    assert all(h.shape == (BATCH, SEQ, HIDDEN) for h in out["hidden_states"])
    assert bool(jnp.all(jnp.isfinite(out["last_hidden_state"])))
    assert bool(jnp.all(jnp.isfinite(out["pooler_output"])))

    print("KERNEL_OK")
</pallas_src>

<mosaic_0001>
module attributes {stable_mosaic.version = 11 : i64} {
  func.func @_stack_kernel(%arg0: i32, %arg1: i32, %arg2: memref<1x24x128xf32, #tpu.memory_space<vmem>>, %arg3: memref<1x2x128xf32, #tpu.memory_space<vmem>>, %arg4: memref<1x128x128xf32, #tpu.memory_space<vmem>>, %arg5: memref<1x1x128xf32, #tpu.memory_space<vmem>>, %arg6: memref<1x32x128xf32, #tpu.memory_space<vmem>>, %arg7: memref<1x1x128xf32, #tpu.memory_space<vmem>>, %arg8: memref<1x2x128xf32, #tpu.memory_space<vmem>>, %arg9: memref<1x128x128xf32, #tpu.memory_space<vmem>>, %arg10: memref<1x1x128xf32, #tpu.memory_space<vmem>>, %arg11: memref<1x128x128xf32, #tpu.memory_space<vmem>>, %arg12: memref<1x1x128xf32, #tpu.memory_space<vmem>>, %arg13: memref<2x128xf32, #tpu.memory_space<vmem>>, %arg14: memref<1x1x24x128xf32, #tpu.memory_space<vmem>>, %arg15: memref<1x24x128xf32, #tpu.memory_space<vmem>>, %arg16: memref<24x128xf32, #tpu.memory_space<vmem>>) attributes {dimension_semantics = [#tpu.dimension_semantics<parallel>, #tpu.dimension_semantics<arbitrary>], iteration_bounds = array<i64: 2, 2>, scalar_prefetch = 0 : i64, scratch_operands = 1 : i64, tpu.core_type = #tpu.core_type<tc>, window_params = [{transform_indices = @transform_0, window_bounds = array<i64: 1, 24, 128>}, {transform_indices = @transform_1, window_bounds = array<i64: 1, 2, 128>}, {transform_indices = @transform_2, window_bounds = array<i64: 1, 128, 128>}, {transform_indices = @transform_3, window_bounds = array<i64: 1, 1, 128>}, {transform_indices = @transform_4, window_bounds = array<i64: 1, 32, 128>}, {transform_indices = @transform_5, window_bounds = array<i64: 1, 1, 128>}, {transform_indices = @transform_6, window_bounds = array<i64: 1, 2, 128>}, {transform_indices = @transform_7, window_bounds = array<i64: 1, 128, 128>}, {transform_indices = @transform_8, window_bounds = array<i64: 1, 1, 128>}, {transform_indices = @transform_9, window_bounds = array<i64: 1, 128, 128>}, {transform_indices = @transform_10, window_bounds = array<i64: 1, 1, 128>}, {pipeline_mode = #tpu.pipeline_mode<synchronous>, transform_indices = @transform_11, window_bounds = array<i64: 2, 128>}, {transform_indices = @transform_12, window_bounds = array<i64: 1, 1, 24, 128>}, {transform_indices = @transform_13, window_bounds = array<i64: 1, 24, 128>}]} {
    %c0_i32 = arith.constant 0 : i32
    %0 = arith.cmpi eq, %arg1, %c0_i32 : i32
    %1 = arith.extui %0 : i1 to i32
    %c0_i32_0 = arith.constant 0 : i32
    %2 = arith.cmpi ne, %1, %c0_i32_0 : i32
    scf.if %2 {
      %c0_85 = arith.constant 0 : index
      %c0_86 = arith.constant 0 : index
      %c0_87 = arith.constant 0 : index
      %192 = vector.load %arg2[%c0_85, %c0_86, %c0_87] : memref<1x24x128xf32, #tpu.memory_space<vmem>>, vector<1x24x128xf32>
      %193 = vector.shape_cast %192 : vector<1x24x128xf32> to vector<24x128xf32>
      %c0_88 = arith.constant 0 : index
      %c0_89 = arith.constant 0 : index
      %194 = vector.load %arg16[%c0_88, %c0_89] : memref<24x128xf32, #tpu.memory_space<vmem>>, vector<24x128xf32>
      tpu.vector_store %arg16[%c0_88, %c0_89], %193 {strides = array<i32>} : memref<24x128xf32, #tpu.memory_space<vmem>>, vector<24x128xf32>,
    } else {
    }
    %c0 = arith.constant 0 : index
    %c0_1 = arith.constant 0 : index
    %3 = vector.load %arg16[%c0, %c0_1] : memref<24x128xf32, #tpu.memory_space<vmem>>, vector<24x128xf32>
    %4 = tpu.iota {dimensions = array<i32: 1>} : vector<24x128xi32>
    %c32_i32 = arith.constant 32 : i32
    %5 = vector.broadcast %c32_i32 : i32 to vector<24x128xi32>
    %6 = arith.cmpi slt, %4, %5 : vector<24x128xi32>
    %7 = arith.extui %6 : vector<24x128xi1> to vector<24x128xi32>
    %8 = arith.sitofp %7 : vector<24x128xi32> to vector<24x128xf32>
    %c0_2 = arith.constant 0 : index
    %c0_3 = arith.constant 0 : index
    %c0_4 = arith.constant 0 : index
    %9 = vector.load %arg3[%c0_2, %c0_3, %c0_4] : memref<1x2x128xf32, #tpu.memory_space<vmem>>, vector<1x2x128xf32>
    %10 = vector.shape_cast %9 : vector<1x2x128xf32> to vector<2x128xf32>
    %cst = arith.constant dense<0.000000e+00> : vector<24xf32>
    %11 = vector.multi_reduction <add>, %3, %cst [1] : vector<24x128xf32> to vector<24xf32>
    %12 = vector.shape_cast %11 : vector<24xf32> to vector<24x1xf32>
    %cst_5 = arith.constant 3.125000e-02 : f32
    %13 = vector.broadcast %cst_5 : f32 to vector<24x1xf32>
    %14 = arith.mulf %12, %13 : vector<24x1xf32>
    %15 = vector.broadcast %14 : vector<24x1xf32> to vector<24x128xf32>
    %16 = arith.subf %3, %15 : vector<24x128xf32>
    %17 = arith.mulf %16, %8 : vector<24x128xf32>
    %18 = arith.mulf %17, %17 : vector<24x128xf32>
    %cst_6 = arith.constant dense<0.000000e+00> : vector<24xf32>
    %19 = vector.multi_reduction <add>, %18, %cst_6 [1] : vector<24x128xf32> to vector<24xf32>
    %20 = vector.shape_cast %19 : vector<24xf32> to vector<24x1xf32>
    %cst_7 = arith.constant 3.125000e-02 : f32
    %21 = vector.broadcast %cst_7 : f32 to vector<24x1xf32>
    %22 = arith.mulf %20, %21 : vector<24x1xf32>
    %23 = vector.broadcast %14 : vector<24x1xf32> to vector<24x128xf32>
    %24 = arith.subf %3, %23 : vector<24x128xf32>
    %cst_8 = arith.constant 9.99999996E-13 : f32
    %25 = vector.broadcast %cst_8 : f32 to vector<24x1xf32>
    %26 = arith.addf %22, %25 : vector<24x1xf32>
    %27 = math.rsqrt %26 : vector<24x1xf32>
    %28 = vector.broadcast %27 : vector<24x1xf32> to vector<24x128xf32>
    %29 = arith.mulf %24, %28 : vector<24x128xf32>
    %30 = vector.extract_strided_slice %10 {offsets = [0, 0], sizes = [1, 128], strides = [1, 1]} : vector<2x128xf32> to vector<1x128xf32>
    %31 = vector.broadcast %30 : vector<1x128xf32> to vector<24x128xf32>
    %32 = arith.mulf %29, %31 : vector<24x128xf32>
    %33 = vector.extract_strided_slice %10 {offsets = [1, 0], sizes = [1, 128], strides = [1, 1]} : vector<2x128xf32> to vector<1x128xf32>
    %34 = vector.broadcast %33 : vector<1x128xf32> to vector<24x128xf32>
    %35 = arith.addf %32, %34 : vector<24x128xf32>
    %c0_9 = arith.constant 0 : index
    %c0_10 = arith.constant 0 : index
    %c0_11 = arith.constant 0 : index
    %36 = vector.load %arg4[%c0_9, %c0_10, %c0_11] : memref<1x128x128xf32, #tpu.memory_space<vmem>>, vector<1x128x128xf32>
    %37 = vector.shape_cast %36 : vector<1x128x128xf32> to vector<128x128xf32>
    %cst_12 = arith.constant dense<0.000000e+00> : vector<24x128xf32>
    %38 = tpu.matmul %35, %37, %cst_12 {dimension_numbers = #tpu.dot_dimension_numbers<[1], [0], [0], [1], [0, 0, 1, 1], [], []>} : vector<24x128xf32>, vector<128x128xf32>, vector<24x128xf32> -> vector<24x128xf32>
    %c0_13 = arith.constant 0 : index
    %c0_14 = arith.constant 0 : index
    %c0_15 = arith.constant 0 : index
    %39 = vector.load %arg5[%c0_13, %c0_14, %c0_15] : memref<1x1x128xf32, #tpu.memory_space<vmem>>, vector<1x1x128xf32>
    %40 = vector.shape_cast %39 : vector<1x1x128xf32> to vector<1x128xf32>
    %41 = vector.broadcast %40 : vector<1x128xf32> to vector<24x128xf32>
    %42 = arith.addf %38, %41 : vector<24x128xf32>
    %43 = tpu.iota {dimensions = array<i32: 1>} : vector<24x24xi32>
    %c17_i32 = arith.constant 17 : i32
    %44 = vector.broadcast %c17_i32 : i32 to vector<24x24xi32>
    %45 = arith.cmpi slt, %43, %44 : vector<24x24xi32>
    %c0_16 = arith.constant 0 : index
    %c0_17 = arith.constant 0 : index
    %c0_18 = arith.constant 0 : index
    %46 = vector.load %arg7[%c0_16, %c0_17, %c0_18] : memref<1x1x128xf32, #tpu.memory_space<vmem>>, vector<1x1x128xf32>
    %47 = vector.shape_cast %46 : vector<1x1x128xf32> to vector<1x128xf32>
    %48 = vector.broadcast %47 : vector<1x128xf32> to vector<24x128xf32>
    %49 = arith.addf %3, %48 : vector<24x128xf32>
    %50 = vector.extract_strided_slice %42 {offsets = [0, 0], sizes = [24, 8], strides = [1, 1]} : vector<24x128xf32> to vector<24x8xf32>
    %51 = vector.extract_strided_slice %42 {offsets = [0, 32], sizes = [24, 8], strides = [1, 1]} : vector<24x128xf32> to vector<24x8xf32>
    %52 = vector.extract_strided_slice %42 {offsets = [0, 64], sizes = [24, 8], strides = [1, 1]} : vector<24x128xf32> to vector<24x8xf32>
    %cst_19 = arith.constant dense<0.000000e+00> : vector<24x24xf32>
    %53 = tpu.matmul %50, %51, %cst_19 {dimension_numbers = #tpu.dot_dimension_numbers<[1], [1], [0], [0], [0, 0, 1, 0], [], []>} : vector<24x8xf32>, vector<24x8xf32>, vector<24x24xf32> -> vector<24x24xf32>
    %cst_20 = arith.constant -1.000000e+30 : f32
    %54 = vector.broadcast %cst_20 : f32 to vector<24x24xf32>
    %55 = arith.select %45, %53, %54 : vector<24x24xi1>, vector<24x24xf32>
    %cst_21 = arith.constant dense<0xFF800000> : vector<24xf32>
    %56 = vector.multi_reduction <maximumf>, %55, %cst_21 [1] : vector<24x24xf32> to vector<24xf32>
    %57 = vector.shape_cast %56 : vector<24xf32> to vector<24x1xf32>
    %58 = vector.broadcast %57 : vector<24x1xf32> to vector<24x24xf32>
    %59 = arith.subf %55, %58 : vector<24x24xf32>
    %60 = math.exp %59 : vector<24x24xf32>
    %cst_22 = arith.constant dense<0.000000e+00> : vector<24xf32>
    %61 = vector.multi_reduction <add>, %60, %cst_22 [1] : vector<24x24xf32> to vector<24xf32>
    %62 = vector.shape_cast %61 : vector<24xf32> to vector<24x1xf32>
    %63 = vector.broadcast %62 : vector<24x1xf32> to vector<24x24xf32>
    %64 = arith.divf %60, %63 : vector<24x24xf32>
    %cst_23 = arith.constant dense<0.000000e+00> : vector<24x8xf32>
    %65 = tpu.matmul %64, %52, %cst_23 {dimension_numbers = #tpu.dot_dimension_numbers<[1], [0], [0], [1], [0, 0, 1, 1], [], []>} : vector<24x24xf32>, vector<24x8xf32>, vector<24x8xf32> -> vector<24x8xf32>
    %c0_24 = arith.constant 0 : index
    %c0_25 = arith.constant 0 : index
    %c0_26 = arith.constant 0 : index
    %66 = vector.load %arg6[%c0_24, %c0_25, %c0_26] : memref<1x32x128xf32, #tpu.memory_space<vmem>>, vector<1x8x128xf32>
    %67 = vector.shape_cast %66 : vector<1x8x128xf32> to vector<8x128xf32>
    %cst_27 = arith.constant dense<0.000000e+00> : vector<24x128xf32>
    %68 = tpu.matmul %65, %67, %cst_27 {dimension_numbers = #tpu.dot_dimension_numbers<[1], [0], [0], [1], [0, 0, 1, 1], [], []>} : vector<24x8xf32>, vector<8x128xf32>, vector<24x128xf32> -> vector<24x128xf32>
    %69 = arith.addf %49, %68 : vector<24x128xf32>
    %70 = vector.extract_strided_slice %42 {offsets = [0, 8], sizes = [24, 8], strides = [1, 1]} : vector<24x128xf32> to vector<24x8xf32>
    %71 = vector.extract_strided_slice %42 {offsets = [0, 40], sizes = [24, 8], strides = [1, 1]} : vector<24x128xf32> to vector<24x8xf32>
    %72 = vector.extract_strided_slice %42 {offsets = [0, 72], sizes = [24, 8], strides = [1, 1]} : vector<24x128xf32> to vector<24x8xf32>
    %cst_28 = arith.constant dense<0.000000e+00> : vector<24x24xf32>
    %73 = tpu.matmul %70, %71, %cst_28 {dimension_numbers = #tpu.dot_dimension_numbers<[1], [1], [0], [0], [0, 0, 1, 0], [], []>} : vector<24x8xf32>, vector<24x8xf32>, vector<24x24xf32> -> vector<24x24xf32>
    %cst_29 = arith.constant -1.000000e+30 : f32
    %74 = vector.broadcast %cst_29 : f32 to vector<24x24xf32>
    %75 = arith.select %45, %73, %74 : vector<24x24xi1>, vector<24x24xf32>
    %cst_30 = arith.constant dense<0xFF800000> : vector<24xf32>
    %76 = vector.multi_reduction <maximumf>, %75, %cst_30 [1] : vector<24x24xf32> to vector<24xf32>
    %77 = vector.shape_cast %76 : vector<24xf32> to vector<24x1xf32>
    %78 = vector.broadcast %77 : vector<24x1xf32> to vector<24x24xf32>
    %79 = arith.subf %75, %78 : vector<24x24xf32>
    %80 = math.exp %79 : vector<24x24xf32>
    %cst_31 = arith.constant dense<0.000000e+00> : vector<24xf32>
    %81 = vector.multi_reduction <add>, %80, %cst_31 [1] : vector<24x24xf32> to vector<24xf32>
    %82 = vector.shape_cast %81 : vector<24xf32> to vector<24x1xf32>
    %83 = vector.broadcast %82 : vector<24x1xf32> to vector<24x24xf32>
    %84 = arith.divf %80, %83 : vector<24x24xf32>
    %cst_32 = arith.constant dense<0.000000e+00> : vector<24x8xf32>
    %85 = tpu.matmul %84, %72, %cst_32 {dimension_numbers = #tpu.dot_dimension_numbers<[1], [0], [0], [1], [0, 0, 1, 1], [], []>} : vector<24x24xf32>, vector<24x8xf32>, vector<24x8xf32> -> vector<24x8xf32>
    %c0_33 = arith.constant 0 : index
    %c8 = arith.constant 8 : index
    %c0_34 = arith.constant 0 : index
    %86 = vector.load %arg6[%c0_33, %c8, %c0_34] : memref<1x32x128xf32, #tpu.memory_space<vmem>>, vector<1x8x128xf32>
    %87 = vector.shape_cast %86 : vector<1x8x128xf32> to vector<8x128xf32>
    %cst_35 = arith.constant dense<0.000000e+00> : vector<24x128xf32>
    %88 = tpu.matmul %85, %87, %cst_35 {dimension_numbers = #tpu.dot_dimension_numbers<[1], [0], [0], [1], [0, 0, 1, 1], [], []>} : vector<24x8xf32>, vector<8x128xf32>, vector<24x128xf32> -> vector<24x128xf32>
    %89 = arith.addf %69, %88 : vector<24x128xf32>
    %90 = vector.extract_strided_slice %42 {offsets = [0, 16], sizes = [24, 8], strides = [1, 1]} : vector<24x128xf32> to vector<24x8xf32>
    %91 = vector.extract_strided_slice %42 {offsets = [0, 48], sizes = [24, 8], strides = [1, 1]} : vector<24x128xf32> to vector<24x8xf32>
    %92 = vector.extract_strided_slice %42 {offsets = [0, 80], sizes = [24, 8], strides = [1, 1]} : vector<24x128xf32> to vector<24x8xf32>
    %cst_36 = arith.constant dense<0.000000e+00> : vector<24x24xf32>
    %93 = tpu.matmul %90, %91, %cst_36 {dimension_numbers = #tpu.dot_dimension_numbers<[1], [1], [0], [0], [0, 0, 1, 0], [], []>} : vector<24x8xf32>, vector<24x8xf32>, vector<24x24xf32> -> vector<24x24xf32>
    %cst_37 = arith.constant -1.000000e+30 : f32
    %94 = vector.broadcast %cst_37 : f32 to vector<24x24xf32>
    %95 = arith.select %45, %93, %94 : vector<24x24xi1>, vector<24x24xf32>
    %cst_38 = arith.constant dense<0xFF800000> : vector<24xf32>
    %96 = vector.multi_reduction <maximumf>, %95, %cst_38 [1] : vector<24x24xf32> to vector<24xf32>
    %97 = vector.shape_cast %96 : vector<24xf32> to vector<24x1xf32>
    %98 = vector.broadcast %97 : vector<24x1xf32> to vector<24x24xf32>
    %99 = arith.subf %95, %98 : vector<24x24xf32>
    %100 = math.exp %99 : vector<24x24xf32>
    %cst_39 = arith.constant dense<0.000000e+00> : vector<24xf32>
    %101 = vector.multi_reduction <add>, %100, %cst_39 [1] : vector<24x24xf32> to vector<24xf32>
    %102 = vector.shape_cast %101 : vector<24xf32> to vector<24x1xf32>
    %103 = vector.broadcast %102 : vector<24x1xf32> to vector<24x24xf32>
    %104 = arith.divf %100, %103 : vector<24x24xf32>
    %cst_40 = arith.constant dense<0.000000e+00> : vector<24x8xf32>
    %105 = tpu.matmul %104, %92, %cst_40 {dimension_numbers = #tpu.dot_dimension_numbers<[1], [0], [0], [1], [0, 0, 1, 1], [], []>} : vector<24x24xf32>, vector<24x8xf32>, vector<24x8xf32> -> vector<24x8xf32>
    %c0_41 = arith.constant 0 : index
    %c16 = arith.constant 16 : index
    %c0_42 = arith.constant 0 : index
    %106 = vector.load %arg6[%c0_41, %c16, %c0_42] : memref<1x32x128xf32, #tpu.memory_space<vmem>>, vector<1x8x128xf32>
    %107 = vector.shape_cast %106 : vector<1x8x128xf32> to vector<8x128xf32>
    %cst_43 = arith.constant dense<0.000000e+00> : vector<24x128xf32>
    %108 = tpu.matmul %105, %107, %cst_43 {dimension_numbers = #tpu.dot_dimension_numbers<[1], [0], [0], [1], [0, 0, 1, 1], [], []>} : vector<24x8xf32>, vector<8x128xf32>, vector<24x128xf32> -> vector<24x128xf32>
    %109 = arith.addf %89, %108 : vector<24x128xf32>
    %110 = vector.extract_strided_slice %42 {offsets = [0, 24], sizes = [24, 8], strides = [1, 1]} : vector<24x128xf32> to vector<24x8xf32>
    %111 = vector.extract_strided_slice %42 {offsets = [0, 56], sizes = [24, 8], strides = [1, 1]} : vector<24x128xf32> to vector<24x8xf32>
    %112 = vector.extract_strided_slice %42 {offsets = [0, 88], sizes = [24, 8], strides = [1, 1]} : vector<24x128xf32> to vector<24x8xf32>
    %cst_44 = arith.constant dense<0.000000e+00> : vector<24x24xf32>
    %113 = tpu.matmul %110, %111, %cst_44 {dimension_numbers = #tpu.dot_dimension_numbers<[1], [1], [0], [0], [0, 0, 1, 0], [], []>} : vector<24x8xf32>, vector<24x8xf32>, vector<24x24xf32> -> vector<24x24xf32>
    %cst_45 = arith.constant -1.000000e+30 : f32
    %114 = vector.broadcast %cst_45 : f32 to vector<24x24xf32>
    %115 = arith.select %45, %113, %114 : vector<24x24xi1>, vector<24x24xf32>
    %cst_46 = arith.constant dense<0xFF800000> : vector<24xf32>
    %116 = vector.multi_reduction <maximumf>, %115, %cst_46 [1] : vector<24x24xf32> to vector<24xf32>
    %117 = vector.shape_cast %116 : vector<24xf32> to vector<24x1xf32>
    %118 = vector.broadcast %117 : vector<24x1xf32> to vector<24x24xf32>
    %119 = arith.subf %115, %118 : vector<24x24xf32>
    %120 = math.exp %119 : vector<24x24xf32>
    %cst_47 = arith.constant dense<0.000000e+00> : vector<24xf32>
    %121 = vector.multi_reduction <add>, %120, %cst_47 [1] : vector<24x24xf32> to vector<24xf32>
    %122 = vector.shape_cast %121 : vector<24xf32> to vector<24x1xf32>
    %123 = vector.broadcast %122 : vector<24x1xf32> to vector<24x24xf32>
    %124 = arith.divf %120, %123 : vector<24x24xf32>
    %cst_48 = arith.constant dense<0.000000e+00> : vector<24x8xf32>
    %125 = tpu.matmul %124, %112, %cst_48 {dimension_numbers = #tpu.dot_dimension_numbers<[1], [0], [0], [1], [0, 0, 1, 1], [], []>} : vector<24x24xf32>, vector<24x8xf32>, vector<24x8xf32> -> vector<24x8xf32>
    %c0_49 = arith.constant 0 : index
    %c24 = arith.constant 24 : index
    %c0_50 = arith.constant 0 : index
    %126 = vector.load %arg6[%c0_49, %c24, %c0_50] : memref<1x32x128xf32, #tpu.memory_space<vmem>>, vector<1x8x128xf32>
    %127 = vector.shape_cast %126 : vector<1x8x128xf32> to vector<8x128xf32>
    %cst_51 = arith.constant dense<0.000000e+00> : vector<24x128xf32>
    %128 = tpu.matmul %125, %127, %cst_51 {dimension_numbers = #tpu.dot_dimension_numbers<[1], [0], [0], [1], [0, 0, 1, 1], [], []>} : vector<24x8xf32>, vector<8x128xf32>, vector<24x128xf32> -> vector<24x128xf32>
    %129 = arith.addf %109, %128 : vector<24x128xf32>
    %c0_52 = arith.constant 0 : index
    %c0_53 = arith.constant 0 : index
    %c0_54 = arith.constant 0 : index
    %130 = vector.load %arg8[%c0_52, %c0_53, %c0_54] : memref<1x2x128xf32, #tpu.memory_space<vmem>>, vector<1x2x128xf32>
    %131 = vector.shape_cast %130 : vector<1x2x128xf32> to vector<2x128xf32>
    %cst_55 = arith.constant dense<0.000000e+00> : vector<24xf32>
    %132 = vector.multi_reduction <add>, %129, %cst_55 [1] : vector<24x128xf32> to vector<24xf32>
    %133 = vector.shape_cast %132 : vector<24xf32> to vector<24x1xf32>
    %cst_56 = arith.constant 3.125000e-02 : f32
    %134 = vector.broadcast %cst_56 : f32 to vector<24x1xf32>
    %135 = arith.mulf %133, %134 : vector<24x1xf32>
    %136 = vector.broadcast %135 : vector<24x1xf32> to vector<24x128xf32>
    %137 = arith.subf %129, %136 : vector<24x128xf32>
    %138 = arith.mulf %137, %8 : vector<24x128xf32>
    %139 = arith.mulf %138, %138 : vector<24x128xf32>
    %cst_57 = arith.constant dense<0.000000e+00> : vector<24xf32>
    %140 = vector.multi_reduction <add>, %139, %cst_57 [1] : vector<24x128xf32> to vector<24xf32>
    %141 = vector.shape_cast %140 : vector<24xf32> to vector<24x1xf32>
    %cst_58 = arith.constant 3.125000e-02 : f32
    %142 = vector.broadcast %cst_58 : f32 to vector<24x1xf32>
    %143 = arith.mulf %141, %142 : vector<24x1xf32>
    %144 = vector.broadcast %135 : vector<24x1xf32> to vector<24x128xf32>
    %145 = arith.subf %129, %144 : vector<24x128xf32>
    %cst_59 = arith.constant 9.99999996E-13 : f32
    %146 = vector.broadcast %cst_59 : f32 to vector<24x1xf32>
    %147 = arith.addf %143, %146 : vector<24x1xf32>
    %148 = math.rsqrt %147 : vector<24x1xf32>
    %149 = vector.broadcast %148 : vector<24x1xf32> to vector<24x128xf32>
    %150 = arith.mulf %145, %149 : vector<24x128xf32>
    %151 = vector.extract_strided_slice %131 {offsets = [0, 0], sizes = [1, 128], strides = [1, 1]} : vector<2x128xf32> to vector<1x128xf32>
    %152 = vector.broadcast %151 : vector<1x128xf32> to vector<24x128xf32>
    %153 = arith.mulf %150, %152 : vector<24x128xf32>
    %154 = vector.extract_strided_slice %131 {offsets = [1, 0], sizes = [1, 128], strides = [1, 1]} : vector<2x128xf32> to vector<1x128xf32>
    %155 = vector.broadcast %154 : vector<1x128xf32> to vector<24x128xf32>
    %156 = arith.addf %153, %155 : vector<24x128xf32>
    %c0_60 = arith.constant 0 : index
    %c0_61 = arith.constant 0 : index
    %c0_62 = arith.constant 0 : index
    %157 = vector.load %arg9[%c0_60, %c0_61, %c0_62] : memref<1x128x128xf32, #tpu.memory_space<vmem>>, vector<1x128x128xf32>
    %158 = vector.shape_cast %157 : vector<1x128x128xf32> to vector<128x128xf32>
    %cst_63 = arith.constant dense<0.000000e+00> : vector<24x128xf32>
    %159 = tpu.matmul %156, %158, %cst_63 {dimension_numbers = #tpu.dot_dimension_numbers<[1], [0], [0], [1], [0, 0, 1, 1], [], []>} : vector<24x128xf32>, vector<128x128xf32>, vector<24x128xf32> -> vector<24x128xf32>
    %c0_64 = arith.constant 0 : index
    %c0_65 = arith.constant 0 : index
    %c0_66 = arith.constant 0 : index
    %160 = vector.load %arg10[%c0_64, %c0_65, %c0_66] : memref<1x1x128xf32, #tpu.memory_space<vmem>>, vector<1x1x128xf32>
    %161 = vector.shape_cast %160 : vector<1x1x128xf32> to vector<1x128xf32>
    %162 = vector.broadcast %161 : vector<1x128xf32> to vector<24x128xf32>
    %163 = arith.addf %159, %162 : vector<24x128xf32>
    %cst_67 = arith.constant 5.000000e-01 : f32
    %164 = vector.broadcast %cst_67 : f32 to vector<24x128xf32>
    %165 = arith.mulf %164, %163 : vector<24x128xf32>
    %cst_68 = arith.constant 4.471500e-02 : f32
    %166 = vector.broadcast %cst_68 : f32 to vector<24x128xf32>
    %167 = arith.mulf %166, %163 : vector<24x128xf32>
    %168 = arith.mulf %167, %163 : vector<24x128xf32>
    %169 = arith.mulf %168, %163 : vector<24x128xf32>
    %170 = arith.addf %163, %169 : vector<24x128xf32>
    %cst_69 = arith.constant 0.797884583 : f32
    %171 = vector.broadcast %cst_69 : f32 to vector<24x128xf32>
    %172 = arith.mulf %171, %170 : vector<24x128xf32>
    %173 = math.tanh %172 : vector<24x128xf32>
    %cst_70 = arith.constant 1.000000e+00 : f32
    %174 = vector.broadcast %cst_70 : f32 to vector<24x128xf32>
    %175 = arith.addf %174, %173 : vector<24x128xf32>
    %176 = arith.mulf %165, %175 : vector<24x128xf32>
    %c0_71 = arith.constant 0 : index
    %c0_72 = arith.constant 0 : index
    %c0_73 = arith.constant 0 : index
    %177 = vector.load %arg11[%c0_71, %c0_72, %c0_73] : memref<1x128x128xf32, #tpu.memory_space<vmem>>, vector<1x128x128xf32>
    %178 = vector.shape_cast %177 : vector<1x128x128xf32> to vector<128x128xf32>
    %cst_74 = arith.constant dense<0.000000e+00> : vector<24x128xf32>
    %179 = tpu.matmul %176, %178, %cst_74 {dimension_numbers = #tpu.dot_dimension_numbers<[1], [0], [0], [1], [0, 0, 1, 1], [], []>} : vector<24x128xf32>, vector<128x128xf32>, vector<24x128xf32> -> vector<24x128xf32>
    %c0_75 = arith.constant 0 : index
    %c0_76 = arith.constant 0 : index
    %c0_77 = arith.constant 0 : index
    %180 = vector.load %arg12[%c0_75, %c0_76, %c0_77] : memref<1x1x128xf32, #tpu.memory_space<vmem>>, vector<1x1x128xf32>
    %181 = vector.shape_cast %180 : vector<1x1x128xf32> to vector<1x128xf32>
    %182 = vector.broadcast %181 : vector<1x128xf32> to vector<24x128xf32>
    %183 = arith.addf %179, %182 : vector<24x128xf32>
    %184 = arith.addf %183, %129 : vector<24x128xf32>
    %c0_78 = arith.constant 0 : index
    %c0_79 = arith.constant 0 : index
    %185 = vector.load %arg16[%c0_78, %c0_79] : memref<24x128xf32, #tpu.memory_space<vmem>>, vector<24x128xf32>
    tpu.vector_store %arg16[%c0_78, %c0_79], %184 {strides = array<i32>} : memref<24x128xf32, #tpu.memory_space<vmem>>, vector<24x128xf32>,
    %c0_80 = arith.constant 0 : index
    %c0_81 = arith.constant 0 : index
    %c0_82 = arith.constant 0 : index
    %c0_83 = arith.constant 0 : index
    %186 = vector.load %arg14[%c0_80, %c0_81, %c0_82, %c0_83] : memref<1x1x24x128xf32, #tpu.memory_space<vmem>>, vector<1x1x24x128xf32>
    %187 = vector.shape_cast %186 : vector<1x1x24x128xf32> to vector<24x128xf32>
    %188 = vector.shape_cast %184 : vector<24x128xf32> to vector<1x1x24x128xf32>
    tpu.vector_store %arg14[%c0_80, %c0_81, %c0_82, %c0_83], %188 {strides = array<i32>} : memref<1x1x24x128xf32, #tpu.memory_space<vmem>>, vector<1x1x24x128xf32>,
    %c1_i32 = arith.constant 1 : i32
    %189 = arith.cmpi eq, %arg1, %c1_i32 : i32
    %190 = arith.extui %189 : i1 to i32
    %c0_i32_84 = arith.constant 0 : i32
    %191 = arith.cmpi ne, %190, %c0_i32_84 : i32
    scf.if %191 {
      %c0_85 = arith.constant 0 : index
      %c0_86 = arith.constant 0 : index
      %192 = vector.load %arg13[%c0_85, %c0_86] : memref<2x128xf32, #tpu.memory_space<vmem>>, vector<2x128xf32>
      %cst_87 = arith.constant dense<0.000000e+00> : vector<24xf32>
      %193 = vector.multi_reduction <add>, %184, %cst_87 [1] : vector<24x128xf32> to vector<24xf32>
      %194 = vector.shape_cast %193 : vector<24xf32> to vector<24x1xf32>
      %cst_88 = arith.constant 3.125000e-02 : f32
      %195 = vector.broadcast %cst_88 : f32 to vector<24x1xf32>
      %196 = arith.mulf %194, %195 : vector<24x1xf32>
      %197 = vector.broadcast %196 : vector<24x1xf32> to vector<24x128xf32>
      %198 = arith.subf %184, %197 : vector<24x128xf32>
      %199 = arith.mulf %198, %8 : vector<24x128xf32>
      %200 = arith.mulf %199, %199 : vector<24x128xf32>
      %cst_89 = arith.constant dense<0.000000e+00> : vector<24xf32>
      %201 = vector.multi_reduction <add>, %200, %cst_89 [1] : vector<24x128xf32> to vector<24xf32>
      %202 = vector.shape_cast %201 : vector<24xf32> to vector<24x1xf32>
      %cst_90 = arith.constant 3.125000e-02 : f32
      %203 = vector.broadcast %cst_90 : f32 to vector<24x1xf32>
      %204 = arith.mulf %202, %203 : vector<24x1xf32>
      %205 = vector.broadcast %196 : vector<24x1xf32> to vector<24x128xf32>
      %206 = arith.subf %184, %205 : vector<24x128xf32>
      %cst_91 = arith.constant 9.99999996E-13 : f32
      %207 = vector.broadcast %cst_91 : f32 to vector<24x1xf32>
      %208 = arith.addf %204, %207 : vector<24x1xf32>
      %209 = math.rsqrt %208 : vector<24x1xf32>
      %210 = vector.broadcast %209 : vector<24x1xf32> to vector<24x128xf32>
      %211 = arith.mulf %206, %210 : vector<24x128xf32>
      %212 = vector.extract_strided_slice %192 {offsets = [0, 0], sizes = [1, 128], strides = [1, 1]} : vector<2x128xf32> to vector<1x128xf32>
      %213 = vector.broadcast %212 : vector<1x128xf32> to vector<24x128xf32>
      %214 = arith.mulf %211, %213 : vector<24x128xf32>
      %215 = vector.extract_strided_slice %192 {offsets = [1, 0], sizes = [1, 128], strides = [1, 1]} : vector<2x128xf32> to vector<1x128xf32>
      %216 = vector.broadcast %215 : vector<1x128xf32> to vector<24x128xf32>
      %217 = arith.addf %214, %216 : vector<24x128xf32>
      %c0_92 = arith.constant 0 : index
      %c0_93 = arith.constant 0 : index
      %c0_94 = arith.constant 0 : index
      %218 = vector.load %arg15[%c0_92, %c0_93, %c0_94] : memref<1x24x128xf32, #tpu.memory_space<vmem>>, vector<1x24x128xf32>
      %219 = vector.shape_cast %218 : vector<1x24x128xf32> to vector<24x128xf32>
      %220 = vector.shape_cast %217 : vector<24x128xf32> to vector<1x24x128xf32>
      tpu.vector_store %arg15[%c0_92, %c0_93, %c0_94], %220 {strides = array<i32>} : memref<1x24x128xf32, #tpu.memory_space<vmem>>, vector<1x24x128xf32>,
    } else {
    }
    return
  }
  func.func @transform_0(%arg0: i32, %arg1: i32) -> (i32, i32, i32) {
    %c0_i32 = arith.constant 0 : i32
    %c0_i32_0 = arith.constant 0 : i32
    %c0_i32_1 = arith.constant 0 : i32
    return %arg0, %c0_i32, %c0_i32_0 : i32, i32, i32
  }
  func.func @transform_1(%arg0: i32, %arg1: i32) -> (i32, i32, i32) {
    %c0_i32 = arith.constant 0 : i32
    %c0_i32_0 = arith.constant 0 : i32
    %c0_i32_1 = arith.constant 0 : i32
    return %arg1, %c0_i32, %c0_i32_0 : i32, i32, i32
  }
  func.func @transform_2(%arg0: i32, %arg1: i32) -> (i32, i32, i32) {
    %c0_i32 = arith.constant 0 : i32
    %c0_i32_0 = arith.constant 0 : i32
    %c0_i32_1 = arith.constant 0 : i32
    return %arg1, %c0_i32, %c0_i32_0 : i32, i32, i32
  }
  func.func @transform_3(%arg0: i32, %arg1: i32) -> (i32, i32, i32) {
    %c0_i32 = arith.constant 0 : i32
    %c0_i32_0 = arith.constant 0 : i32
    %c0_i32_1 = arith.constant 0 : i32
    return %arg1, %c0_i32, %c0_i32_0 : i32, i32, i32
  }
  func.func @transform_4(%arg0: i32, %arg1: i32) -> (i32, i32, i32) {
    %c0_i32 = arith.constant 0 : i32
    %c0_i32_0 = arith.constant 0 : i32
    %c0_i32_1 = arith.constant 0 : i32
    return %arg1, %c0_i32, %c0_i32_0 : i32, i32, i32
  }
  func.func @transform_5(%arg0: i32, %arg1: i32) -> (i32, i32, i32) {
    %c0_i32 = arith.constant 0 : i32
    %c0_i32_0 = arith.constant 0 : i32
    %c0_i32_1 = arith.constant 0 : i32
    return %arg1, %c0_i32, %c0_i32_0 : i32, i32, i32
  }
  func.func @transform_6(%arg0: i32, %arg1: i32) -> (i32, i32, i32) {
    %c0_i32 = arith.constant 0 : i32
    %c0_i32_0 = arith.constant 0 : i32
    %c0_i32_1 = arith.constant 0 : i32
    return %arg1, %c0_i32, %c0_i32_0 : i32, i32, i32
  }
  func.func @transform_7(%arg0: i32, %arg1: i32) -> (i32, i32, i32) {
    %c0_i32 = arith.constant 0 : i32
    %c0_i32_0 = arith.constant 0 : i32
    %c0_i32_1 = arith.constant 0 : i32
    return %arg1, %c0_i32, %c0_i32_0 : i32, i32, i32
  }
  func.func @transform_8(%arg0: i32, %arg1: i32) -> (i32, i32, i32) {
    %c0_i32 = arith.constant 0 : i32
    %c0_i32_0 = arith.constant 0 : i32
    %c0_i32_1 = arith.constant 0 : i32
    return %arg1, %c0_i32, %c0_i32_0 : i32, i32, i32
  }
  func.func @transform_9(%arg0: i32, %arg1: i32) -> (i32, i32, i32) {
    %c0_i32 = arith.constant 0 : i32
    %c0_i32_0 = arith.constant 0 : i32
    %c0_i32_1 = arith.constant 0 : i32
    return %arg1, %c0_i32, %c0_i32_0 : i32, i32, i32
  }
  func.func @transform_10(%arg0: i32, %arg1: i32) -> (i32, i32, i32) {
    %c0_i32 = arith.constant 0 : i32
    %c0_i32_0 = arith.constant 0 : i32
    %c0_i32_1 = arith.constant 0 : i32
    return %arg1, %c0_i32, %c0_i32_0 : i32, i32, i32
  }
  func.func @transform_11(%arg0: i32, %arg1: i32) -> (i32, i32) {
    %c0_i32 = arith.constant 0 : i32
    %c0_i32_0 = arith.constant 0 : i32
    %c0_i32_1 = arith.constant 0 : i32
    return %c0_i32, %c0_i32_0 : i32, i32
  }
  func.func @transform_12(%arg0: i32, %arg1: i32) -> (i32, i32, i32, i32) {
    %c0_i32 = arith.constant 0 : i32
    %c0_i32_0 = arith.constant 0 : i32
    %c0_i32_1 = arith.constant 0 : i32
    return %arg1, %arg0, %c0_i32, %c0_i32_0 : i32, i32, i32, i32
  }
  func.func @transform_13(%arg0: i32, %arg1: i32) -> (i32, i32, i32) {
    %c0_i32 = arith.constant 0 : i32
    %c0_i32_0 = arith.constant 0 : i32
    %c0_i32_1 = arith.constant 0 : i32
    return %arg0, %c0_i32, %c0_i32_0 : i32, i32, i32
  }
}

</mosaic_0001>

<llo_original>
// kernel: ast_forward.1
$region0: #{ast_forward.1}
  #allocation0 [shape = 'u32[]', space=smem, size = 0x4, offset = 0x4, fixed_abs, tag = 'smem constant byte address 0x4 - core index']
  #allocation1 [shape = 'u32[72,128]{1,0:T(1,128)}', space=vmem, size = 0x9000, scoped, tag = 'internal scratch']
  #allocation2 [shape = 'f32[24,128]{1,0:T(8,128)}', space=vmem, size = 0x3000, scoped, tag = 'scratch operand']
  %s0 = inlined_call_operand.vmem [shape: f32[2,24,128], index: 0, kind: input, shape index: {}]
  %s1 = inlined_call_operand.vmem [shape: f32[2,2,128], index: 1, kind: input, shape index: {}]
  %s2 = inlined_call_operand.vmem [shape: f32[2,128,128], index: 2, kind: input, shape index: {}]
  %s3 = inlined_call_operand.vmem [shape: f32[2,1,128], index: 3, kind: input, shape index: {}]
  %s4 = inlined_call_operand.vmem [shape: f32[2,32,128], index: 4, kind: input, shape index: {}]
  %s5 = inlined_call_operand.vmem [shape: f32[2,1,128], index: 5, kind: input, shape index: {}]
  %s6 = inlined_call_operand.vmem [shape: f32[2,2,128], index: 6, kind: input, shape index: {}]
  %s7 = inlined_call_operand.vmem [shape: f32[2,128,128], index: 7, kind: input, shape index: {}]
  %s8 = inlined_call_operand.vmem [shape: f32[2,1,128], index: 8, kind: input, shape index: {}]
  %s9 = inlined_call_operand.vmem [shape: f32[2,128,128], index: 9, kind: input, shape index: {}]
  %s10 = inlined_call_operand.vmem [shape: f32[2,1,128], index: 10, kind: input, shape index: {}]
  %s11 = inlined_call_operand.vmem [shape: f32[2,128], index: 11, kind: input, shape index: {}]
  %s12 = inlined_call_operand.vmem [shape: f32[2,2,24,128], index: 12, kind: output, shape index: {0}]
  %s13 = inlined_call_operand.vmem [shape: f32[2,24,128], index: 13, kind: output, shape index: {1}]
  %14 = xla_tuple %s12, %s13
  %s15 = sld [smem:[#allocation0]]
  $region97: #{ast_forward.1} parent=0
    _
  %s17 = ssub.s32 1, %s15
  %s18 = scalar_select 0, %s17, %s15
  loop: start=0, step=1, limit=6
  $region2: #{ast_forward.1} parent=0 // loop_pre_header
    _
  $region3: #{ast_forward.1} parent=0 // loop_header
    %s20 = sphi 0, %s24
    %p21 = scmp.ge.s32.totalorder %s20, 6
    %s27 = sphi 0, %s39
    %s28 = sphi 0, %s35
    %s29 = sphi 0, %s27
    %s30 = sphi 0, %s28
    %s31 = sphi 0, %s29
    %s32 = sphi 0, %s30
    %s42 = sphi 0, %s44
    %s45 = sphi 0, %s42
    %s46 = sphi 0, %s45
    %s62 = sphi 0, %s46
    %s68 = sphi 0, %s70
    %s71 = sphi 0, %s68
    %s72 = sphi 0, %s71
    %s88 = sphi 0, %s72
    %s94 = sphi 0, %s96
    %s97 = sphi 0, %s94
    %s98 = sphi 0, %s97
    %s114 = sphi 0, %s98
    %s120 = sphi 0, %s122
    %s123 = sphi 0, %s120
    %s124 = sphi 0, %s123
    %s140 = sphi 0, %s124
    %s146 = sphi 0, %s148
    %s149 = sphi 0, %s146
    %s150 = sphi 0, %s149
    %s166 = sphi 0, %s150
    %s172 = sphi 0, %s174
    %s175 = sphi 0, %s172
    %s176 = sphi 0, %s175
    %s192 = sphi 0, %s176
    %s198 = sphi 0, %s200
    %s201 = sphi 0, %s198
    %s202 = sphi 0, %s201
    %s218 = sphi 0, %s202
    %s224 = sphi 0, %s226
    %s227 = sphi 0, %s224
    %s228 = sphi 0, %s227
    %s244 = sphi 0, %s228
    %s250 = sphi 0, %s252
    %s253 = sphi 0, %s250
    %s254 = sphi 0, %s253
    %s270 = sphi 0, %s254
    %s276 = sphi 0, %s278
    %s279 = sphi 0, %s276
    %s280 = sphi 0, %s279
    %s296 = sphi 0, %s280
    %s302 = sphi 0, %s304
    %s305 = sphi 0, %s302
    %s306 = sphi 0, %s305
    %s322 = sphi 0, %s306
    %s326 = sphi 0, %s326
    %s328 = sphi 0, %s326
    %s329 = sphi 0, %s328
    %s343 = sphi 0, %s329
    %s351 = sphi 0, %s353
    %s354 = sphi 0, %s351
    %s355 = sphi 0, %s354
    %s371 = sphi 0, %s355
    %s377 = sphi 0, %s379
    %s380 = sphi 0, %s377
    %s381 = sphi 0, %s380
    %s397 = sphi 0, %s381
  $region4: #{ast_forward.1} parent=0 // loop_header_branch
    %23 = sbr.rel (%p21) target = $region8
  $region5: #{ast_forward.1} parent=0 // loop_body
    %s25 = ssub.s32 %s20, 1
    %s26 = ssub.s32 %s20, 2
    %s33 = sadd.s32 1, %s28
    %p34 = scmp.ge.s32.totalorder %s33, 2
    %s35 = scalar_select %p34, 0, %s33
    %s36 = sadd.s32 1, %s27
    %s37 = scalar_select %p34, %s36, %s27
    %p38 = scmp.ge.s32.totalorder %s37, 2
    %s39 = scalar_select %p38, 0, %s37
    %s40 = ssub.s32 %s27, %s39
    %p41 = scmp.eq.s32.totalorder %s40, 0
    %s43 = sadd.s32 %s42, 1
    %s44 = scalar_select %p41, %s42, %s43
    %p47 = pneg %p41
    %p48 = scmp.eq.s32.totalorder %s20, 3
    %p49 = por %p47, %p48
    %p50 = scmp.ne.s32.totalorder %s42, %s45
    %p51 = scmp.eq.s32.totalorder %s20, 0
    %p52 = por %p50, %p51
    %p53 = scmp.ne.s32.totalorder %s42, %s45
    %p54 = scmp.eq.s32.totalorder %s25, 3
    %p55 = por %p53, %p54
    %p56 = scmp.ne.s32.totalorder %s45, %s46
    %p57 = scmp.eq.s32.totalorder %s25, 0
    %p58 = por %p56, %p57
    %p59 = scmp.ne.s32.totalorder %s45, %s46
    %p60 = scmp.eq.s32.totalorder %s26, 3
    %p61 = por %p59, %p60
    %p63 = scmp.ne.s32.totalorder %s46, %s62
    %p64 = scmp.eq.s32.totalorder %s26, 0
    %p65 = por %p63, %p64
    %s66 = ssub.s32 %s28, %s35
    %p67 = scmp.eq.s32.totalorder %s66, 0
    %s69 = sadd.s32 %s68, 1
    %s70 = scalar_select %p67, %s68, %s69
    %p73 = pneg %p67
    %p74 = scmp.eq.s32.totalorder %s20, 3
    %p75 = por %p73, %p74
    %p76 = scmp.ne.s32.totalorder %s68, %s71
    %p77 = scmp.eq.s32.totalorder %s20, 0
    %p78 = por %p76, %p77
    %p79 = scmp.ne.s32.totalorder %s68, %s71
    %p80 = scmp.eq.s32.totalorder %s25, 3
    %p81 = por %p79, %p80
    %p82 = scmp.ne.s32.totalorder %s71, %s72
    %p83 = scmp.eq.s32.totalorder %s25, 0
    %p84 = por %p82, %p83
    %p85 = scmp.ne.s32.totalorder %s71, %s72
    %p86 = scmp.eq.s32.totalorder %s26, 3
    %p87 = por %p85, %p86
    %p89 = scmp.ne.s32.totalorder %s72, %s88
    %p90 = scmp.eq.s32.totalorder %s26, 0
    %p91 = por %p89, %p90
    %s92 = ssub.s32 %s28, %s35
    %p93 = scmp.eq.s32.totalorder %s92, 0
    %s95 = sadd.s32 %s94, 1
    %s96 = scalar_select %p93, %s94, %s95
    %p99 = pneg %p93
    %p100 = scmp.eq.s32.totalorder %s20, 3
    %p101 = por %p99, %p100
    %p102 = scmp.ne.s32.totalorder %s94, %s97
    %p103 = scmp.eq.s32.totalorder %s20, 0
    %p104 = por %p102, %p103
    %p105 = scmp.ne.s32.totalorder %s94, %s97
    %p106 = scmp.eq.s32.totalorder %s25, 3
    %p107 = por %p105, %p106
    %p108 = scmp.ne.s32.totalorder %s97, %s98
    %p109 = scmp.eq.s32.totalorder %s25, 0
    %p110 = por %p108, %p109
    %p111 = scmp.ne.s32.totalorder %s97, %s98
    %p112 = scmp.eq.s32.totalorder %s26, 3
    %p113 = por %p111, %p112
    %p115 = scmp.ne.s32.totalorder %s98, %s114
    %p116 = scmp.eq.s32.totalorder %s26, 0
    %p117 = por %p115, %p116
    %s118 = ssub.s32 %s28, %s35
    %p119 = scmp.eq.s32.totalorder %s118, 0
    %s121 = sadd.s32 %s120, 1
    %s122 = scalar_select %p119, %s120, %s121
    %p125 = pneg %p119
    %p126 = scmp.eq.s32.totalorder %s20, 3
    %p127 = por %p125, %p126
    %p128 = scmp.ne.s32.totalorder %s120, %s123
    %p129 = scmp.eq.s32.totalorder %s20, 0
    %p130 = por %p128, %p129
    %p131 = scmp.ne.s32.totalorder %s120, %s123
    %p132 = scmp.eq.s32.totalorder %s25, 3
    %p133 = por %p131, %p132
    %p134 = scmp.ne.s32.totalorder %s123, %s124
    %p135 = scmp.eq.s32.totalorder %s25, 0
    %p136 = por %p134, %p135
    %p137 = scmp.ne.s32.totalorder %s123, %s124
    %p138 = scmp.eq.s32.totalorder %s26, 3
    %p139 = por %p137, %p138
    %p141 = scmp.ne.s32.totalorder %s124, %s140
    %p142 = scmp.eq.s32.totalorder %s26, 0
    %p143 = por %p141, %p142
    %s144 = ssub.s32 %s28, %s35
    %p145 = scmp.eq.s32.totalorder %s144, 0
    %s147 = sadd.s32 %s146, 1
    %s148 = scalar_select %p145, %s146, %s147
    %p151 = pneg %p145
    %p152 = scmp.eq.s32.totalorder %s20, 3
    %p153 = por %p151, %p152
    %p154 = scmp.ne.s32.totalorder %s146, %s149
    %p155 = scmp.eq.s32.totalorder %s20, 0
    %p156 = por %p154, %p155
    %p157 = scmp.ne.s32.totalorder %s146, %s149
    %p158 = scmp.eq.s32.totalorder %s25, 3
    %p159 = por %p157, %p158
    %p160 = scmp.ne.s32.totalorder %s149, %s150
    %p161 = scmp.eq.s32.totalorder %s25, 0
    %p162 = por %p160, %p161
    %p163 = scmp.ne.s32.totalorder %s149, %s150
    %p164 = scmp.eq.s32.totalorder %s26, 3
    %p165 = por %p163, %p164
    %p167 = scmp.ne.s32.totalorder %s150, %s166
    %p168 = scmp.eq.s32.totalorder %s26, 0
    %p169 = por %p167, %p168
    %s170 = ssub.s32 %s28, %s35
    %p171 = scmp.eq.s32.totalorder %s170, 0
    %s173 = sadd.s32 %s172, 1
    %s174 = scalar_select %p171, %s172, %s173
    %p177 = pneg %p171
    %p178 = scmp.eq.s32.totalorder %s20, 3
    %p179 = por %p177, %p178
    %p180 = scmp.ne.s32.totalorder %s172, %s175
    %p181 = scmp.eq.s32.totalorder %s20, 0
    %p182 = por %p180, %p181
    %p183 = scmp.ne.s32.totalorder %s172, %s175
    %p184 = scmp.eq.s32.totalorder %s25, 3
    %p185 = por %p183, %p184
    %p186 = scmp.ne.s32.totalorder %s175, %s176
    %p187 = scmp.eq.s32.totalorder %s25, 0
    %p188 = por %p186, %p187
    %p189 = scmp.ne.s32.totalorder %s175, %s176
    %p190 = scmp.eq.s32.totalorder %s26, 3
    %p191 = por %p189, %p190
    %p193 = scmp.ne.s32.totalorder %s176, %s192
    %p194 = scmp.eq.s32.totalorder %s26, 0
    %p195 = por %p193, %p194
    %s196 = ssub.s32 %s28, %s35
    %p197 = scmp.eq.s32.totalorder %s196, 0
    %s199 = sadd.s32 %s198, 1
    %s200 = scalar_select %p197, %s198, %s199
    %p203 = pneg %p197
    %p204 = scmp.eq.s32.totalorder %s20, 3
    %p205 = por %p203, %p204
    %p206 = scmp.ne.s32.totalorder %s198, %s201
    %p207 = scmp.eq.s32.totalorder %s20, 0
    %p208 = por %p206, %p207
    %p209 = scmp.ne.s32.totalorder %s198, %s201
    %p210 = scmp.eq.s32.totalorder %s25, 3
    %p211 = por %p209, %p210
    %p212 = scmp.ne.s32.totalorder %s201, %s202
    %p213 = scmp.eq.s32.totalorder %s25, 0
    %p214 = por %p212, %p213
    %p215 = scmp.ne.s32.totalorder %s201, %s202
    %p216 = scmp.eq.s32.totalorder %s26, 3
    %p217 = por %p215, %p216
    %p219 = scmp.ne.s32.totalorder %s202, %s218
    %p220 = scmp.eq.s32.totalorder %s26, 0
    %p221 = por %p219, %p220
    %s222 = ssub.s32 %s28, %s35
    %p223 = scmp.eq.s32.totalorder %s222, 0
    %s225 = sadd.s32 %s224, 1
    %s226 = scalar_select %p223, %s224, %s225
    %p229 = pneg %p223
    %p230 = scmp.eq.s32.totalorder %s20, 3
    %p231 = por %p229, %p230
    %p232 = scmp.ne.s32.totalorder %s224, %s227
    %p233 = scmp.eq.s32.totalorder %s20, 0
    %p234 = por %p232, %p233
    %p235 = scmp.ne.s32.totalorder %s224, %s227
    %p236 = scmp.eq.s32.totalorder %s25, 3
    %p237 = por %p235, %p236
    %p238 = scmp.ne.s32.totalorder %s227, %s228
    %p239 = scmp.eq.s32.totalorder %s25, 0
    %p240 = por %p238, %p239
    %p241 = scmp.ne.s32.totalorder %s227, %s228
    %p242 = scmp.eq.s32.totalorder %s26, 3
    %p243 = por %p241, %p242
    %p245 = scmp.ne.s32.totalorder %s228, %s244
    %p246 = scmp.eq.s32.totalorder %s26, 0
    %p247 = por %p245, %p246
    %s248 = ssub.s32 %s28, %s35
    %p249 = scmp.eq.s32.totalorder %s248, 0
    %s251 = sadd.s32 %s250, 1
    %s252 = scalar_select %p249, %s250, %s251
    %p255 = pneg %p249
    %p256 = scmp.eq.s32.totalorder %s20, 3
    %p257 = por %p255, %p256
    %p258 = scmp.ne.s32.totalorder %s250, %s253
    %p259 = scmp.eq.s32.totalorder %s20, 0
    %p260 = por %p258, %p259
    %p261 = scmp.ne.s32.totalorder %s250, %s253
    %p262 = scmp.eq.s32.totalorder %s25, 3
    %p263 = por %p261, %p262
    %p264 = scmp.ne.s32.totalorder %s253, %s254
    %p265 = scmp.eq.s32.totalorder %s25, 0
    %p266 = por %p264, %p265
    %p267 = scmp.ne.s32.totalorder %s253, %s254
    %p268 = scmp.eq.s32.totalorder %s26, 3
    %p269 = por %p267, %p268
    %p271 = scmp.ne.s32.totalorder %s254, %s270
    %p272 = scmp.eq.s32.totalorder %s26, 0
    %p273 = por %p271, %p272
    %s274 = ssub.s32 %s28, %s35
    %p275 = scmp.eq.s32.totalorder %s274, 0
    %s277 = sadd.s32 %s276, 1
    %s278 = scalar_select %p275, %s276, %s277
    %p281 = pneg %p275
    %p282 = scmp.eq.s32.totalorder %s20, 3
    %p283 = por %p281, %p282
    %p284 = scmp.ne.s32.totalorder %s276, %s279
    %p285 = scmp.eq.s32.totalorder %s20, 0
    %p286 = por %p284, %p285
    %p287 = scmp.ne.s32.totalorder %s276, %s279
    %p288 = scmp.eq.s32.totalorder %s25, 3
    %p289 = por %p287, %p288
    %p290 = scmp.ne.s32.totalorder %s279, %s280
    %p291 = scmp.eq.s32.totalorder %s25, 0
    %p292 = por %p290, %p291
    %p293 = scmp.ne.s32.totalorder %s279, %s280
    %p294 = scmp.eq.s32.totalorder %s26, 3
    %p295 = por %p293, %p294
    %p297 = scmp.ne.s32.totalorder %s280, %s296
    %p298 = scmp.eq.s32.totalorder %s26, 0
    %p299 = por %p297, %p298
    %s300 = ssub.s32 %s28, %s35
    %p301 = scmp.eq.s32.totalorder %s300, 0
    %s303 = sadd.s32 %s302, 1
    %s304 = scalar_select %p301, %s302, %s303
    %p307 = pneg %p301
    %p308 = scmp.eq.s32.totalorder %s20, 3
    %p309 = por %p307, %p308
    %p310 = scmp.ne.s32.totalorder %s302, %s305
    %p311 = scmp.eq.s32.totalorder %s20, 0
    %p312 = por %p310, %p311
    %p313 = scmp.ne.s32.totalorder %s302, %s305
    %p314 = scmp.eq.s32.totalorder %s25, 3
    %p315 = por %p313, %p314
    %p316 = scmp.ne.s32.totalorder %s305, %s306
    %p317 = scmp.eq.s32.totalorder %s25, 0
    %p318 = por %p316, %p317
    %p319 = scmp.ne.s32.totalorder %s305, %s306
    %p320 = scmp.eq.s32.totalorder %s26, 3
    %p321 = por %p319, %p320
    %p323 = scmp.ne.s32.totalorder %s306, %s322
    %p324 = scmp.eq.s32.totalorder %s26, 0
    %p325 = por %p323, %p324
    %s327 = sadd.s32 %s326, 1
    %p330 = scmp.eq.s32.totalorder %s20, 3
    %p331 = scmp.ne.s32.totalorder %s326, %s328
    %p332 = scmp.eq.s32.totalorder %s20, 0
    %p333 = por %p331, %p332
    %p334 = scmp.ne.s32.totalorder %s326, %s328
    %p335 = scmp.eq.s32.totalorder %s25, 3
    %p336 = por %p334, %p335
    %p337 = scmp.ne.s32.totalorder %s328, %s329
    %p338 = scmp.eq.s32.totalorder %s25, 0
    %p339 = por %p337, %p338
    %p340 = scmp.ne.s32.totalorder %s328, %s329
    %p341 = scmp.eq.s32.totalorder %s26, 3
    %p342 = por %p340, %p341
    %p344 = scmp.ne.s32.totalorder %s329, %s343
    %p345 = scmp.eq.s32.totalorder %s26, 0
    %p346 = por %p344, %p345
    %s347 = ssub.s32 %s28, %s35
    %s348 = ssub.s32 %s27, %s39
    %s349 = sor.u32 %s347, %s348
    %p350 = scmp.eq.s32.totalorder %s349, 0
    %s352 = sadd.s32 %s351, 1
    %s353 = scalar_select %p350, %s351, %s352
    %p356 = pneg %p350
    %p357 = scmp.eq.s32.totalorder %s20, 3
    %p358 = por %p356, %p357
    %p359 = scmp.ne.s32.totalorder %s351, %s354
    %p360 = scmp.eq.s32.totalorder %s20, 0
    %p361 = por %p359, %p360
    %p362 = scmp.ne.s32.totalorder %s351, %s354
    %p363 = scmp.eq.s32.totalorder %s25, 3
    %p364 = por %p362, %p363
    %p365 = scmp.ne.s32.totalorder %s354, %s355
    %p366 = scmp.eq.s32.totalorder %s25, 0
    %p367 = por %p365, %p366
    %p368 = scmp.ne.s32.totalorder %s354, %s355
    %p369 = scmp.eq.s32.totalorder %s26, 3
    %p370 = por %p368, %p369
    %p372 = scmp.ne.s32.totalorder %s355, %s371
    %p373 = scmp.eq.s32.totalorder %s26, 0
    %p374 = por %p372, %p373
    %s375 = ssub.s32 %s27, %s39
    %p376 = scmp.eq.s32.totalorder %s375, 0
    %s378 = sadd.s32 %s377, 1
    %s379 = scalar_select %p376, %s377, %s378
    %p382 = pneg %p376
    %p383 = scmp.eq.s32.totalorder %s20, 3
    %p384 = por %p382, %p383
    %p385 = scmp.ne.s32.totalorder %s377, %s380
    %p386 = scmp.eq.s32.totalorder %s20, 0
    %p387 = por %p385, %p386
    %p388 = scmp.ne.s32.totalorder %s377, %s380
    %p389 = scmp.eq.s32.totalorder %s25, 3
    %p390 = por %p388, %p389
    %p391 = scmp.ne.s32.totalorder %s380, %s381
    %p392 = scmp.eq.s32.totalorder %s25, 0
    %p393 = por %p391, %p392
    %p394 = scmp.ne.s32.totalorder %s380, %s381
    %p395 = scmp.eq.s32.totalorder %s26, 3
    %p396 = por %p394, %p395
    %p398 = scmp.ne.s32.totalorder %s381, %s397
    %p399 = scmp.eq.s32.totalorder %s26, 0
    %p400 = por %p398, %p399
    %p401 = scmp.le.s32.totalorder 1, %s20
    %p402 = scmp.lt.s32.totalorder %s20, 5
    %p403 = pnand %p401, %p402
    %p404 = pneg %p403
    // Predicated region
    $region9: #{ast_forward.1} parent=5 // pred_check
      _
    $region10: #{ast_forward.1} parent=5 // pred_check_branch
      %406 = sbr.rel (%p403) target = $region12
    $region11: #{ast_forward.1} parent=5 // pred_region
      %s407 = ssub.s32 %s20, 1
      // Predicated region
      $region13: #{ast_forward.1} parent=11 // pred_check
        %p408 = pneg %p339
      $region14: #{ast_forward.1} parent=11 // pred_check_branch
        %410 = sbr.rel (%p408) target = $region16
      $region15: #{ast_forward.1} parent=11 // pred_region
        _
      $region16: #{ast_forward.1} parent=11 // pred_fallthru
        _
    $region12: #{ast_forward.1} parent=5 // pred_fallthru
      _
    %p411 = scmp.lt.s32.totalorder %s20, 4
    // Predicated region
    $region17: #{ast_forward.1} parent=5 // pred_check
      %p412 = pneg %p411
    $region18: #{ast_forward.1} parent=5 // pred_check_branch
      %414 = sbr.rel (%p412) target = $region20
    $region19: #{ast_forward.1} parent=5 // pred_region
      // Predicated region
      $region21: #{ast_forward.1} parent=19 // pred_check
        %p415 = pneg %p52
      $region22: #{ast_forward.1} parent=19 // pred_check_branch
        %417 = sbr.rel (%p415) target = $region24
      $region23: #{ast_forward.1} parent=19 // pred_region
        %p418 = scmp.lt.s32.totalorder %s27, 1
        %s419 = scalar_select %p418, %s27, 1
        %s420 = smul.addr %s419, 3
        %s421 = smul.addr %s420, 8
        %s422 = scalar_lea.vmem %s0, %s421
      $region24: #{ast_forward.1} parent=19 // pred_fallthru
        _
      // Predicated region
      $region25: #{ast_forward.1} parent=19 // pred_check
        %p423 = pneg %p78
      $region26: #{ast_forward.1} parent=19 // pred_check_branch
        %425 = sbr.rel (%p423) target = $region28
      $region27: #{ast_forward.1} parent=19 // pred_region
        %p426 = scmp.lt.s32.totalorder %s28, 1
        %s427 = scalar_select %p426, %s28, 1
        %s428 = smul.addr %s427, 2
        %s429 = scalar_lea.vmem %s1, %s428
      $region28: #{ast_forward.1} parent=19 // pred_fallthru
        _
      // Predicated region
      $region29: #{ast_forward.1} parent=19 // pred_check
        %p430 = pneg %p104
      $region30: #{ast_forward.1} parent=19 // pred_check_branch
        %432 = sbr.rel (%p430) target = $region32
      $region31: #{ast_forward.1} parent=19 // pred_region
        %p433 = scmp.lt.s32.totalorder %s28, 1
        %s434 = scalar_select %p433, %s28, 1
        %s435 = smul.addr %s434, 16
        %s436 = smul.addr %s435, 8
        %s437 = scalar_lea.vmem %s2, %s436
      $region32: #{ast_forward.1} parent=19 // pred_fallthru
        _
      // Predicated region
      $region33: #{ast_forward.1} parent=19 // pred_check
        %p438 = pneg %p130
      $region34: #{ast_forward.1} parent=19 // pred_check_branch
        %440 = sbr.rel (%p438) target = $region36
      $region35: #{ast_forward.1} parent=19 // pred_region
        %p441 = scmp.lt.s32.totalorder %s28, 1
        %s442 = scalar_select %p441, %s28, 1
        %s443 = scalar_lea.vmem %s3, %s442
      $region36: #{ast_forward.1} parent=19 // pred_fallthru
        _
      // Predicated region
      $region37: #{ast_forward.1} parent=19 // pred_check
        %p444 = pneg %p156
      $region38: #{ast_forward.1} parent=19 // pred_check_branch
        %446 = sbr.rel (%p444) target = $region40
      $region39: #{ast_forward.1} parent=19 // pred_region
        %p447 = scmp.lt.s32.totalorder %s28, 1
        %s448 = scalar_select %p447, %s28, 1
        %s449 = smul.addr %s448, 4
        %s450 = smul.addr %s449, 8
        %s451 = scalar_lea.vmem %s4, %s450
      $region40: #{ast_forward.1} parent=19 // pred_fallthru
        _
      // Predicated region
      $region41: #{ast_forward.1} parent=19 // pred_check
        %p452 = pneg %p182
      $region42: #{ast_forward.1} parent=19 // pred_check_branch
        %454 = sbr.rel (%p452) target = $region44
      $region43: #{ast_forward.1} parent=19 // pred_region
        %p455 = scmp.lt.s32.totalorder %s28, 1
        %s456 = scalar_select %p455, %s28, 1
        %s457 = scalar_lea.vmem %s5, %s456
      $region44: #{ast_forward.1} parent=19 // pred_fallthru
        _
      // Predicated region
      $region45: #{ast_forward.1} parent=19 // pred_check
        %p458 = pneg %p208
      $region46: #{ast_forward.1} parent=19 // pred_check_branch
        %460 = sbr.rel (%p458) target = $region48
      $region47: #{ast_forward.1} parent=19 // pred_region
        %p461 = scmp.lt.s32.totalorder %s28, 1
        %s462 = scalar_select %p461, %s28, 1
        %s463 = smul.addr %s462, 2
        %s464 = scalar_lea.vmem %s6, %s463
      $region48: #{ast_forward.1} parent=19 // pred_fallthru
        _
      // Predicated region
      $region49: #{ast_forward.1} parent=19 // pred_check
        %p465 = pneg %p234
      $region50: #{ast_forward.1} parent=19 // pred_check_branch
        %467 = sbr.rel (%p465) target = $region52
      $region51: #{ast_forward.1} parent=19 // pred_region
        %p468 = scmp.lt.s32.totalorder %s28, 1
        %s469 = scalar_select %p468, %s28, 1
        %s470 = smul.addr %s469, 16
        %s471 = smul.addr %s470, 8
        %s472 = scalar_lea.vmem %s7, %s471
      $region52: #{ast_forward.1} parent=19 // pred_fallthru
        _
      // Predicated region
      $region53: #{ast_forward.1} parent=19 // pred_check
        %p473 = pneg %p260
      $region54: #{ast_forward.1} parent=19 // pred_check_branch
        %475 = sbr.rel (%p473) target = $region56
      $region55: #{ast_forward.1} parent=19 // pred_region
        %p476 = scmp.lt.s32.totalorder %s28, 1
        %s477 = scalar_select %p476, %s28, 1
        %s478 = scalar_lea.vmem %s8, %s477
      $region56: #{ast_forward.1} parent=19 // pred_fallthru
        _
      // Predicated region
      $region57: #{ast_forward.1} parent=19 // pred_check
        %p479 = pneg %p286
      $region58: #{ast_forward.1} parent=19 // pred_check_branch
        %481 = sbr.rel (%p479) target = $region60
      $region59: #{ast_forward.1} parent=19 // pred_region
        %p482 = scmp.lt.s32.totalorder %s28, 1
        %s483 = scalar_select %p482, %s28, 1
        %s484 = smul.addr %s483, 16
        %s485 = smul.addr %s484, 8
        %s486 = scalar_lea.vmem %s9, %s485
      $region60: #{ast_forward.1} parent=19 // pred_fallthru
        _
      // Predicated region
      $region61: #{ast_forward.1} parent=19 // pred_check
        %p487 = pneg %p312
      $region62: #{ast_forward.1} parent=19 // pred_check_branch
        %489 = sbr.rel (%p487) target = $region64
      $region63: #{ast_forward.1} parent=19 // pred_region
        %p490 = scmp.lt.s32.totalorder %s28, 1
        %s491 = scalar_select %p490, %s28, 1
        %s492 = scalar_lea.vmem %s10, %s491
      $region64: #{ast_forward.1} parent=19 // pred_fallthru
        _
    $region20: #{ast_forward.1} parent=5 // pred_fallthru
      _
    %p493 = scmp.le.s32.totalorder 1, %s20
    %p494 = scmp.lt.s32.totalorder %s20, 5
    %p495 = pnand %p493, %p494
    %p496 = pneg %p495
    // Predicated region
    $region65: #{ast_forward.1} parent=5 // pred_check
      _
    $region66: #{ast_forward.1} parent=5 // pred_check_branch
      %498 = sbr.rel (%p495) target = $region68
    $region67: #{ast_forward.1} parent=5 // pred_region
      %s499 = ssub.s32 %s20, 1
      %p500 = scmp.lt.s32.totalorder %s29, 1
      %s501 = scalar_select %p500, %s29, 1
      %s502 = smul.addr %s501, 3
      %s503 = smul.addr %s502, 8
      %s504 = scalar_lea.vmem %s0, %s503
      %p505 = pneg %p58
      %p506 = pneg %p55
      %p507 = scmp.lt.s32.totalorder %s30, 1
      %s508 = scalar_select %p507, %s30, 1
      %s509 = smul.addr %s508, 2
      %s510 = scalar_lea.vmem %s1, %s509
      %p511 = pneg %p84
      %p512 = pneg %p81
      %p513 = scmp.lt.s32.totalorder %s30, 1
      %s514 = scalar_select %p513, %s30, 1
      %s515 = smul.addr %s514, 16
      %s516 = smul.addr %s515, 8
      %s517 = scalar_lea.vmem %s2, %s516
      %p518 = pneg %p110
      %p519 = pneg %p107
      %p520 = scmp.lt.s32.totalorder %s30, 1
      %s521 = scalar_select %p520, %s30, 1
      %s522 = scalar_lea.vmem %s3, %s521
      %p523 = pneg %p136
      %p524 = pneg %p133
      %p525 = scmp.lt.s32.totalorder %s30, 1
      %s526 = scalar_select %p525, %s30, 1
      %s527 = smul.addr %s526, 4
      %s528 = smul.addr %s527, 8
      %s529 = scalar_lea.vmem %s4, %s528
      %p530 = pneg %p162
      %p531 = pneg %p159
      %p532 = scmp.lt.s32.totalorder %s30, 1
      %s533 = scalar_select %p532, %s30, 1
      %s534 = scalar_lea.vmem %s5, %s533
      %p535 = pneg %p188
      %p536 = pneg %p185
      %p537 = scmp.lt.s32.totalorder %s30, 1
      %s538 = scalar_select %p537, %s30, 1
      %s539 = smul.addr %s538, 2
      %s540 = scalar_lea.vmem %s6, %s539
      %p541 = pneg %p214
      %p542 = pneg %p211
      %p543 = scmp.lt.s32.totalorder %s30, 1
      %s544 = scalar_select %p543, %s30, 1
      %s545 = smul.addr %s544, 16
      %s546 = smul.addr %s545, 8
      %s547 = scalar_lea.vmem %s7, %s546
      %p548 = pneg %p240
      %p549 = pneg %p237
      %p550 = scmp.lt.s32.totalorder %s30, 1
      %s551 = scalar_select %p550, %s30, 1
      %s552 = scalar_lea.vmem %s8, %s551
      %p553 = pneg %p266
      %p554 = pneg %p263
      %p555 = scmp.lt.s32.totalorder %s30, 1
      %s556 = scalar_select %p555, %s30, 1
      %s557 = smul.addr %s556, 16
      %s558 = smul.addr %s557, 8
      %s559 = scalar_lea.vmem %s9, %s558
      %p560 = pneg %p292
      %p561 = pneg %p289
      %p562 = scmp.lt.s32.totalorder %s30, 1
      %s563 = scalar_select %p562, %s30, 1
      %s564 = scalar_lea.vmem %s10, %s563
      %p565 = pneg %p318
      %p566 = pneg %p315
      %p567 = pneg %p339
      %p568 = pneg %p336
      %p569 = pneg %p367
      %p570 = pneg %p364
      %p571 = scmp.lt.s32.totalorder %s30, 1
      %s572 = scalar_select %p571, %s30, 1
      %p573 = scmp.lt.s32.totalorder %s29, 1
      %s574 = scalar_select %p573, %s29, 1
      %s575 = smul.addr %s574, 3
      %s576 = smul.addr %s572, 6
      %s577 = sadd.s32 %s575, %s576
      %s578 = smul.addr %s577, 8
      %s579 = scalar_lea.vmem %s12, %s578
      %p580 = pneg %p393
      %p581 = pneg %p390
      %p582 = scmp.lt.s32.totalorder %s29, 1
      %s583 = scalar_select %p582, %s29, 1
      %s584 = smul.addr %s583, 3
      %s585 = smul.addr %s584, 8
      %s586 = scalar_lea.vmem %s13, %s585
      %p587 = scmp.lt.s32.totalorder %s29, 1
      %s588 = scalar_select %p587, %s29, 1
      %s589 = smul.addr %s588, 3
      %s590 = smul.addr %s589, 8
      %s591 = scalar_lea.vmem %s0, %s590
      %p592 = scmp.lt.s32.totalorder %s30, 1
      %s593 = scalar_select %p592, %s30, 1
      %s594 = smul.addr %s593, 2
      %s595 = scalar_lea.vmem %s1, %s594
      %p596 = scmp.lt.s32.totalorder %s30, 1
      %s597 = scalar_select %p596, %s30, 1
      %s598 = smul.addr %s597, 16
      %s599 = smul.addr %s598, 8
      %s600 = scalar_lea.vmem %s2, %s599
      %p601 = scmp.lt.s32.totalorder %s30, 1
      %s602 = scalar_select %p601, %s30, 1
      %s603 = scalar_lea.vmem %s3, %s602
      %p604 = scmp.lt.s32.totalorder %s30, 1
      %s605 = scalar_select %p604, %s30, 1
      %s606 = smul.addr %s605, 4
      %s607 = smul.addr %s606, 8
      %s608 = scalar_lea.vmem %s4, %s607
      %p609 = scmp.lt.s32.totalorder %s30, 1
      %s610 = scalar_select %p609, %s30, 1
      %s611 = scalar_lea.vmem %s5, %s610
      %p612 = scmp.lt.s32.totalorder %s30, 1
      %s613 = scalar_select %p612, %s30, 1
      %s614 = smul.addr %s613, 2
      %s615 = scalar_lea.vmem %s6, %s614
      %p616 = scmp.lt.s32.totalorder %s30, 1
      %s617 = scalar_select %p616, %s30, 1
      %s618 = smul.addr %s617, 16
      %s619 = smul.addr %s618, 8
      %s620 = scalar_lea.vmem %s7, %s619
      %p621 = scmp.lt.s32.totalorder %s30, 1
      %s622 = scalar_select %p621, %s30, 1
      %s623 = scalar_lea.vmem %s8, %s622
      %p624 = scmp.lt.s32.totalorder %s30, 1
      %s625 = scalar_select %p624, %s30, 1
      %s626 = smul.addr %s625, 16
      %s627 = smul.addr %s626, 8
      %s628 = scalar_lea.vmem %s9, %s627
      %p629 = scmp.lt.s32.totalorder %s30, 1
      %s630 = scalar_select %p629, %s30, 1
      %s631 = scalar_lea.vmem %s10, %s630
      %p632 = scmp.lt.s32.totalorder %s30, 1
      %s633 = scalar_select %p632, %s30, 1
      %p634 = scmp.lt.s32.totalorder %s29, 1
      %s635 = scalar_select %p634, %s29, 1
      %s636 = smul.addr %s635, 3
      %s637 = smul.addr %s633, 6
      %s638 = sadd.s32 %s636, %s637
      %s639 = smul.addr %s638, 8
      %s640 = scalar_lea.vmem %s12, %s639
      %p641 = scmp.lt.s32.totalorder %s29, 1
      %s642 = scalar_select %p641, %s29, 1
      %s643 = smul.addr %s642, 3
      %s644 = smul.addr %s643, 8
      %s645 = scalar_lea.vmem %s13, %s644
      %p646 = scmp.eq.s32.totalorder %s30, 0
      // Predicated region
      $region69: #{ast_forward.1} parent=67 // pred_check
        %p647 = pneg %p646
      $region70: #{ast_forward.1} parent=67 // pred_check_branch
        %649 = sbr.rel (%p647) target = $region72
      $region71: #{ast_forward.1} parent=67 // pred_region
        %v650 = vld [vmem:[%s591] sm:$0xff]
        %v651 = vld [vmem:[%s591 + $0x8] sm:$0xff]
        %v652 = vld [vmem:[%s591 + $0x10] sm:$0xff]
        %653 = vst [vmem:[#allocation2] sm:$0xff] %v650
        %654 = vst [vmem:[#allocation2 + $0x8] sm:$0xff] %v651
        %655 = vst [vmem:[#allocation2 + $0x10] sm:$0xff] %v652
      $region72: #{ast_forward.1} parent=67 // pred_fallthru
        _
      %v656 = vld [vmem:[#allocation2] sm:$0xff]
      %v657 = vld [vmem:[#allocation2 + $0x8] sm:$0xff]
      %v658 = vld [vmem:[#allocation2 + $0x10] sm:$0xff]
      %v659 = vlaneseq
      %v660 = vand.u32 %v659, 127
      %vm661 = vcmp.lt.s32.totalorder %v660, 32
      %v662 = vsel %vm661, 1, 0
      %v663 = vcvt.s32.f32 %v662
      %v664 = vld [vmem:[%s595] sm:$0x3]
      %665 = vadd.xlane.f32.xlu0 %v656
      %v666 = vpop.xlane.xlu0 %665
      %667 = vadd.xlane.f32.xlu0 %v657
      %v668 = vpop.xlane.xlu0 %667
      %669 = vadd.xlane.f32.xlu0 %v658
      %v670 = vpop.xlane.xlu0 %669
      %v671 = vmul.f32 %v666, 0.03125
      %v672 = vmul.f32 %v668, 0.03125
      %v673 = vmul.f32 %v670, 0.03125
      %v674 = vsub.f32 %v656, %v671
      %v675 = vsub.f32 %v657, %v672
      %v676 = vsub.f32 %v658, %v673
      %v677 = vmul.f32 %v674, %v663
      %v678 = vmul.f32 %v675, %v663
      %v679 = vmul.f32 %v676, %v663
      %v680 = vmul.f32 %v677, %v677
      %v681 = vmul.f32 %v678, %v678
      %v682 = vmul.f32 %v679, %v679
      %683 = vadd.xlane.f32.xlu0 %v680
      %v684 = vpop.xlane.xlu0 %683
      %685 = vadd.xlane.f32.xlu0 %v681
      %v686 = vpop.xlane.xlu0 %685
      %687 = vadd.xlane.f32.xlu0 %v682
      %v688 = vpop.xlane.xlu0 %687
      %v689 = vmul.f32 %v684, 0.03125
      %v690 = vmul.f32 %v686, 0.03125
      %v691 = vmul.f32 %v688, 0.03125
      %v692 = vadd.f32 %v689, 1e-12
      %v693 = vadd.f32 %v690, 1e-12
      %v694 = vadd.f32 %v691, 1e-12
      %v695 = vrsqrt.pop %v692
      %v696 = vmul.f32 %v695, %v692
      %v697 = vmul.f32 %v696, %v695
      %v698 = vmul.f32 0.5, %v697
      %v699 = vsub.f32 1.5, %v698
      %v700 = vmul.f32 %v695, %v699
      %vm701 = vweird.f32 %v692
      %vm702 = vweird.f32 %v695
      %vm703 = vmor %vm701, %vm702
      %v704 = vsel %vm703, %v695, %v700
      %v705 = vrsqrt.pop %v693
      %v706 = vmul.f32 %v705, %v693
      %v707 = vmul.f32 %v706, %v705
      %v708 = vmul.f32 0.5, %v707
      %v709 = vsub.f32 1.5, %v708
      %v710 = vmul.f32 %v705, %v709
      %vm711 = vweird.f32 %v693
      %vm712 = vweird.f32 %v705
      %vm713 = vmor %vm711, %vm712
      %v714 = vsel %vm713, %v705, %v710
      %v715 = vrsqrt.pop %v694
      %v716 = vmul.f32 %v715, %v694
      %v717 = vmul.f32 %v716, %v715
      %v718 = vmul.f32 0.5, %v717
      %v719 = vsub.f32 1.5, %v718
      %v720 = vmul.f32 %v715, %v719
      %vm721 = vweird.f32 %v694
      %vm722 = vweird.f32 %v715
      %vm723 = vmor %vm721, %vm722
      %v724 = vsel %vm723, %v715, %v720
      %v725 = vmul.f32 %v674, %v704
      %v726 = vmul.f32 %v675, %v714
      %v727 = vmul.f32 %v676, %v724
      %v728 = vperm.slane %v664, 0
      %v729 = vmul.f32 %v725, %v728
      %v730 = vmul.f32 %v726, %v728
      %v731 = vmul.f32 %v727, %v728
      %v732 = vperm.slane %v664, 1
      %v733 = vadd.f32 %v729, %v732
      %v734 = vadd.f32 %v730, %v732
      %v735 = vadd.f32 %v731, %v732
      %v736 = vld [vmem:[%s600] sm:$0xff]
      %v737 = vld [vmem:[%s600 + $0x8] sm:$0xff]
      %v738 = vld [vmem:[%s600 + $0x10] sm:$0xff]
      %v739 = vld [vmem:[%s600 + $0x18] sm:$0xff]
      %v740 = vld [vmem:[%s600 + $0x20] sm:$0xff]
      %v741 = vld [vmem:[%s600 + $0x28] sm:$0xff]
      %v742 = vld [vmem:[%s600 + $0x30] sm:$0xff]
      %v743 = vld [vmem:[%s600 + $0x38] sm:$0xff]
      %v744 = vld [vmem:[%s600 + $0x40] sm:$0xff]
      %v745 = vld [vmem:[%s600 + $0x48] sm:$0xff]
      %v746 = vld [vmem:[%s600 + $0x50] sm:$0xff]
      %v747 = vld [vmem:[%s600 + $0x58] sm:$0xff]
      %v748 = vld [vmem:[%s600 + $0x60] sm:$0xff]
      %v749 = vld [vmem:[%s600 + $0x68] sm:$0xff]
      %v750 = vld [vmem:[%s600 + $0x70] sm:$0xff]
      %v751 = vld [vmem:[%s600 + $0x78] sm:$0xff]
      %v752 = vld [vmem:[%s603] sm:$0x1]
      %v754 = vperm.slane %v752, 0
      %756 = vmatpush.msra.mxu0 %v751
      %757 = vmatpush.msra.mxu0 %v750
      %758 = vmatpush.msra.mxu0 %v749
      %759 = vmatpush.msra.mxu0 %v748
      %760 = vmatpush.msra.mxu0 %v747
      %761 = vmatpush.msra.mxu0 %v746
      %762 = vmatpush.msra.mxu0 %v745
      %763 = vmatpush.msra.mxu0 %v744
      %764 = vmatpush.msra.mxu0 %v743
      %765 = vmatpush.msra.mxu0 %v742
      %766 = vmatpush.msra.mxu0 %v741
      %767 = vmatpush.msra.mxu0 %v740
      %768 = vmatpush.msra.mxu0 %v739
      %769 = vmatpush.msra.mxu0 %v738
      %770 = vmatpush.msra.mxu0 %v737
      %771 = vmatpush.msra.mxu0 %v736
      %772 = vmatmul.f32.gmra.mxu0 %v733
      %v773 = vpop.f32.mrf.mxu0
      %v774 = vadd.f32 %v754, %v773
      %775 = vmatmul.f32.gmra.mxu0 %v734
      %v776 = vpop.f32.mrf.mxu0
      %v777 = vadd.f32 %v754, %v776
      %778 = vmatmul.f32.gmra.mxu0 %v735
      %v779 = vpop.f32.mrf.mxu0
      %v780 = vadd.f32 %v754, %v779
      %781 = vdwg.mxu0
      %vm782 = vcmp.lt.s32.totalorder %v660, 17
      %v783 = vld [vmem:[%s611] sm:$0x1]
      %v785 = vperm.slane %v783, 0
      %v787 = vadd.f32 %v656, %v785
      %v788 = vadd.f32 %v657, %v785
      %v789 = vadd.f32 %v658, %v785
      %793 = vrot.lane.b32.xlu0 %v774, 96
      %v794 = vpop.permute.xlu0 %793
      %795 = vrot.lane.b32.xlu0 %v777, 96
      %v796 = vpop.permute.xlu0 %795
      %797 = vrot.lane.b32.xlu0 %v780, 96
      %v798 = vpop.permute.xlu0 %797
      %vm799 = vcmask 64512
      %v800 = vsel %vm799, %v774, 0
      %v802 = vsel %vm799, %v777, 0
      %v804 = vsel %vm799, %v780, 0
      %v806 = vsel %vm799, %v794, 0
      %v808 = vsel %vm799, %v796, 0
      %v810 = vsel %vm799, %v798, 0
      %812 = vmatpush.xpose.msra.mxu0 0.0
      %813 = vmatpush.xpose.msra.mxu0 0.0
      %814 = vmatpush.xpose.msra.mxu0 0.0
      %815 = vmatpush.xpose.msra.mxu0 0.0
      %816 = vmatpush.xpose.msra.mxu0 0.0
      %817 = vmatpush.xpose.msra.mxu0 0.0
      %818 = vmatpush.xpose.msra.mxu0 0.0
      %819 = vmatpush.xpose.msra.mxu0 0.0
      %820 = vmatpush.xpose.msra.mxu0 0.0
      %821 = vmatpush.xpose.msra.mxu0 0.0
      %822 = vmatpush.xpose.msra.mxu0 0.0
      %823 = vmatpush.xpose.msra.mxu0 0.0
      %824 = vmatpush.xpose.msra.mxu0 0.0
      %825 = vmatpush.xpose.msra.mxu0 %v810
      %826 = vmatpush.xpose.msra.mxu0 %v808
      %827 = vmatpush.xpose.msra.mxu0 %v806
      %828 = vmatmul.f32.gmra.mxu0 %v800
      %v829 = vpop.f32.mrf.mxu0
      %v830 = vadd.f32 0.0, %v829
      %831 = vmatmul.f32.gmra.mxu0 %v802
      %v832 = vpop.f32.mrf.mxu0
      %v833 = vadd.f32 0.0, %v832
      %834 = vmatmul.f32.gmra.mxu0 %v804
      %v835 = vpop.f32.mrf.mxu0
      %v836 = vadd.f32 0.0, %v835
      %837 = vdwg.mxu0
      %v838 = vsel %vm782, %v830, -1e+30
      %v839 = vsel %vm782, %v833, -1e+30
      %v840 = vsel %vm782, %v836, -1e+30
      %vm841 = vcmask 195584
      %v842 = vsel %vm841, %v838, -inf
      %843 = vmax.xlane.f32.xlu0 %v842
      %v844 = vpop.xlane.xlu0 %843
      %v845 = vsel %vm841, %v839, -inf
      %846 = vmax.xlane.f32.xlu0 %v845
      %v847 = vpop.xlane.xlu0 %846
      %v848 = vsel %vm841, %v840, -inf
      %849 = vmax.xlane.f32.xlu0 %v848
      %v850 = vpop.xlane.xlu0 %849
      %v851 = vsub.f32 %v838, %v844
      %v852 = vsub.f32 %v839, %v847
      %v853 = vsub.f32 %v840, %v850
      %v854 = vmul.f32 %v851, 1.442695
      %v855 = vpow.pop %v854
      %v856 = vmul.f32 %v852, 1.442695
      %v857 = vpow.pop %v856
      %v858 = vmul.f32 %v853, 1.442695
      %v859 = vpow.pop %v858
      %v860 = vsel %vm841, %v855, 0.0
      %861 = vadd.xlane.f32.xlu0 %v860
      %v862 = vpop.xlane.xlu0 %861
      %v863 = vsel %vm841, %v857, 0.0
      %864 = vadd.xlane.f32.xlu0 %v863
      %v865 = vpop.xlane.xlu0 %864
      %v866 = vsel %vm841, %v859, 0.0
      %867 = vadd.xlane.f32.xlu0 %v866
      %v868 = vpop.xlane.xlu0 %867
      %v869 = vrcp.pop %v862
      %v870 = vmul.f32 %v862, %v869
      %v871 = vsub.f32 1.0, %v870
      %v872 = vmul.f32 %v869, %v871
      %v873 = vadd.f32 %v869, %v872
      %vm874 = vweird.f32 %v862
      %vm875 = vweird.f32 %v869
      %vm876 = vmor %vm874, %vm875
      %v877 = vsel %vm876, %v869, %v873
      %v878 = vand.u32 2147483647, %v862
      %vm879 = vcmp.eq.f32.partialorder %v878, 8.507059e+37
      %v880 = vand.u32 %v862, 2147483648
      %v881 = vor.u32 1.1754944e-38, %v880
      %v882 = vsel %vm879, %v881, %v877
      %v883 = vmul.f32 %v855, %v882
      %v884 = vrcp.pop %v865
      %v885 = vmul.f32 %v865, %v884
      %v886 = vsub.f32 1.0, %v885
      %v887 = vmul.f32 %v884, %v886
      %v888 = vadd.f32 %v884, %v887
      %vm889 = vweird.f32 %v865
      %vm890 = vweird.f32 %v884
      %vm891 = vmor %vm889, %vm890
      %v892 = vsel %vm891, %v884, %v888
      %v893 = vand.u32 2147483647, %v865
      %vm894 = vcmp.eq.f32.partialorder %v893, 8.507059e+37
      %v895 = vand.u32 %v865, 2147483648
      %v896 = vor.u32 1.1754944e-38, %v895
      %v897 = vsel %vm894, %v896, %v892
      %v898 = vmul.f32 %v857, %v897
      %v899 = vrcp.pop %v868
      %v900 = vmul.f32 %v868, %v899
      %v901 = vsub.f32 1.0, %v900
      %v902 = vmul.f32 %v899, %v901
      %v903 = vadd.f32 %v899, %v902
      %vm904 = vweird.f32 %v868
      %vm905 = vweird.f32 %v899
      %vm906 = vmor %vm904, %vm905
      %v907 = vsel %vm906, %v899, %v903
      %v908 = vand.u32 2147483647, %v868
      %vm909 = vcmp.eq.f32.partialorder %v908, 8.507059e+37
      %v910 = vand.u32 %v868, 2147483648
      %v911 = vor.u32 1.1754944e-38, %v910
      %v912 = vsel %vm909, %v911, %v907
      %v913 = vmul.f32 %v859, %v912
      %914 = vrot.lane.b32.xlu0 %v774, 64
      %v915 = vpop.permute.xlu0 %914
      %916 = vrot.lane.b32.xlu0 %v777, 64
      %v917 = vpop.permute.xlu0 %916
      %918 = vrot.lane.b32.xlu0 %v780, 64
      %v919 = vpop.permute.xlu0 %918
      %v924 = vsel %vm841, %v883, 0
      %v927 = vsel %vm841, %v898, 0
      %v930 = vsel %vm841, %v913, 0
      %932 = vmatpush.msra.mxu0 0.0
      %933 = vmatpush.msra.mxu0 0.0
      %934 = vmatpush.msra.mxu0 0.0
      %935 = vmatpush.msra.mxu0 0.0
      %936 = vmatpush.msra.mxu0 0.0
      %937 = vmatpush.msra.mxu0 0.0
      %938 = vmatpush.msra.mxu0 0.0
      %939 = vmatpush.msra.mxu0 0.0
      %940 = vmatpush.msra.mxu0 0.0
      %941 = vmatpush.msra.mxu0 0.0
      %942 = vmatpush.msra.mxu0 0.0
      %943 = vmatpush.msra.mxu0 0.0
      %944 = vmatpush.msra.mxu0 0.0
      %945 = vmatpush.msra.mxu0 %v919
      %946 = vmatpush.msra.mxu0 %v917
      %947 = vmatpush.msra.mxu0 %v915
      %948 = vmatmul.f32.gmra.mxu0 %v924
      %v949 = vpop.f32.mrf.mxu0
      %v950 = vadd.f32 0.0, %v949
      %951 = vmatmul.f32.gmra.mxu0 %v927
      %v952 = vpop.f32.mrf.mxu0
      %v953 = vadd.f32 0.0, %v952
      %954 = vmatmul.f32.gmra.mxu0 %v930
      %v955 = vpop.f32.mrf.mxu0
      %v956 = vadd.f32 0.0, %v955
      %957 = vdwg.mxu0
      %v958 = vld [vmem:[%s608] sm:$0xff]
      %v960 = vsel %vm799, %v950, 0
      %v963 = vsel %vm799, %v953, 0
      %v966 = vsel %vm799, %v956, 0
      %968 = vmatpush.msra.mxu0 0.0
      %969 = vmatpush.msra.mxu0 0.0
      %970 = vmatpush.msra.mxu0 0.0
      %971 = vmatpush.msra.mxu0 0.0
      %972 = vmatpush.msra.mxu0 0.0
      %973 = vmatpush.msra.mxu0 0.0
      %974 = vmatpush.msra.mxu0 0.0
      %975 = vmatpush.msra.mxu0 0.0
      %976 = vmatpush.msra.mxu0 0.0
      %977 = vmatpush.msra.mxu0 0.0
      %978 = vmatpush.msra.mxu0 0.0
      %979 = vmatpush.msra.mxu0 0.0
      %980 = vmatpush.msra.mxu0 0.0
      %981 = vmatpush.msra.mxu0 0.0
      %982 = vmatpush.msra.mxu0 0.0
      %983 = vmatpush.msra.mxu0 %v958
      %984 = vmatmul.f32.gmra.mxu0 %v960
      %v985 = vpop.f32.mrf.mxu0
      %v986 = vadd.f32 0.0, %v985
      %987 = vmatmul.f32.gmra.mxu0 %v963
      %v988 = vpop.f32.mrf.mxu0
      %v989 = vadd.f32 0.0, %v988
      %990 = vmatmul.f32.gmra.mxu0 %v966
      %v991 = vpop.f32.mrf.mxu0
      %v992 = vadd.f32 0.0, %v991
      %993 = vdwg.mxu0
      %v994 = vadd.f32 %v787, %v986
      %v995 = vadd.f32 %v788, %v989
      %v996 = vadd.f32 %v789, %v992
      %997 = vrot.lane.b32.xlu0 %v774, 120
      %v998 = vpop.permute.xlu0 %997
      %999 = vrot.lane.b32.xlu0 %v777, 120
      %v1000 = vpop.permute.xlu0 %999
      %1001 = vrot.lane.b32.xlu0 %v780, 120
      %v1002 = vpop.permute.xlu0 %1001
      %1003 = vrot.lane.b32.xlu0 %v774, 88
      %v1004 = vpop.permute.xlu0 %1003
      %1005 = vrot.lane.b32.xlu0 %v777, 88
      %v1006 = vpop.permute.xlu0 %1005
      %1007 = vrot.lane.b32.xlu0 %v780, 88
      %v1008 = vpop.permute.xlu0 %1007
      %v1009 = vsel %vm799, %v998, 0
      %v1011 = vsel %vm799, %v1000, 0
      %v1013 = vsel %vm799, %v1002, 0
      %v1015 = vsel %vm799, %v1004, 0
      %v1017 = vsel %vm799, %v1006, 0
      %v1019 = vsel %vm799, %v1008, 0
      %1021 = vmatpush.xpose.msra.mxu0 0.0
      %1022 = vmatpush.xpose.msra.mxu0 0.0
      %1023 = vmatpush.xpose.msra.mxu0 0.0
      %1024 = vmatpush.xpose.msra.mxu0 0.0
      %1025 = vmatpush.xpose.msra.mxu0 0.0
      %1026 = vmatpush.xpose.msra.mxu0 0.0
      %1027 = vmatpush.xpose.msra.mxu0 0.0
      %1028 = vmatpush.xpose.msra.mxu0 0.0
      %1029 = vmatpush.xpose.msra.mxu0 0.0
      %1030 = vmatpush.xpose.msra.mxu0 0.0
      %1031 = vmatpush.xpose.msra.mxu0 0.0
      %1032 = vmatpush.xpose.msra.mxu0 0.0
      %1033 = vmatpush.xpose.msra.mxu0 0.0
      %1034 = vmatpush.xpose.msra.mxu0 %v1019
      %1035 = vmatpush.xpose.msra.mxu0 %v1017
      %1036 = vmatpush.xpose.msra.mxu0 %v1015
      %1037 = vmatmul.f32.gmra.mxu0 %v1009
      %v1038 = vpop.f32.mrf.mxu0
      %v1039 = vadd.f32 0.0, %v1038
      %1040 = vmatmul.f32.gmra.mxu0 %v1011
      %v1041 = vpop.f32.mrf.mxu0
      %v1042 = vadd.f32 0.0, %v1041
      %1043 = vmatmul.f32.gmra.mxu0 %v1013
      %v1044 = vpop.f32.mrf.mxu0
      %v1045 = vadd.f32 0.0, %v1044
      %1046 = vdwg.mxu0
      %v1047 = vsel %vm782, %v1039, -1e+30
      %v1048 = vsel %vm782, %v1042, -1e+30
      %v1049 = vsel %vm782, %v1045, -1e+30
      %v1050 = vsel %vm841, %v1047, -inf
      %1051 = vmax.xlane.f32.xlu0 %v1050
      %v1052 = vpop.xlane.xlu0 %1051
      %v1053 = vsel %vm841, %v1048, -inf
      %1054 = vmax.xlane.f32.xlu0 %v1053
      %v1055 = vpop.xlane.xlu0 %1054
      %v1056 = vsel %vm841, %v1049, -inf
      %1057 = vmax.xlane.f32.xlu0 %v1056
      %v1058 = vpop.xlane.xlu0 %1057
      %v1059 = vsub.f32 %v1047, %v1052
      %v1060 = vsub.f32 %v1048, %v1055
      %v1061 = vsub.f32 %v1049, %v1058
      %v1062 = vmul.f32 %v1059, 1.442695
      %v1063 = vpow.pop %v1062
      %v1064 = vmul.f32 %v1060, 1.442695
      %v1065 = vpow.pop %v1064
      %v1066 = vmul.f32 %v1061, 1.442695
      %v1067 = vpow.pop %v1066
      %v1068 = vsel %vm841, %v1063, 0.0
      %1069 = vadd.xlane.f32.xlu0 %v1068
      %v1070 = vpop.xlane.xlu0 %1069
      %v1071 = vsel %vm841, %v1065, 0.0
      %1072 = vadd.xlane.f32.xlu0 %v1071
      %v1073 = vpop.xlane.xlu0 %1072
      %v1074 = vsel %vm841, %v1067, 0.0
      %1075 = vadd.xlane.f32.xlu0 %v1074
      %v1076 = vpop.xlane.xlu0 %1075
      %v1077 = vrcp.pop %v1070
      %v1078 = vmul.f32 %v1070, %v1077
      %v1079 = vsub.f32 1.0, %v1078
      %v1080 = vmul.f32 %v1077, %v1079
      %v1081 = vadd.f32 %v1077, %v1080
      %vm1082 = vweird.f32 %v1070
      %vm1083 = vweird.f32 %v1077
      %vm1084 = vmor %vm1082, %vm1083
      %v1085 = vsel %vm1084, %v1077, %v1081
      %v1086 = vand.u32 2147483647, %v1070
      %vm1087 = vcmp.eq.f32.partialorder %v1086, 8.507059e+37
      %v1088 = vand.u32 %v1070, 2147483648
      %v1089 = vor.u32 1.1754944e-38, %v1088
      %v1090 = vsel %vm1087, %v1089, %v1085
      %v1091 = vmul.f32 %v1063, %v1090
      %v1092 = vrcp.pop %v1073
      %v1093 = vmul.f32 %v1073, %v1092
      %v1094 = vsub.f32 1.0, %v1093
      %v1095 = vmul.f32 %v1092, %v1094
      %v1096 = vadd.f32 %v1092, %v1095
      %vm1097 = vweird.f32 %v1073
      %vm1098 = vweird.f32 %v1092
      %vm1099 = vmor %vm1097, %vm1098
      %v1100 = vsel %vm1099, %v1092, %v1096
      %v1101 = vand.u32 2147483647, %v1073
      %vm1102 = vcmp.eq.f32.partialorder %v1101, 8.507059e+37
      %v1103 = vand.u32 %v1073, 2147483648
      %v1104 = vor.u32 1.1754944e-38, %v1103
      %v1105 = vsel %vm1102, %v1104, %v1100
      %v1106 = vmul.f32 %v1065, %v1105
      %v1107 = vrcp.pop %v1076
      %v1108 = vmul.f32 %v1076, %v1107
      %v1109 = vsub.f32 1.0, %v1108
      %v1110 = vmul.f32 %v1107, %v1109
      %v1111 = vadd.f32 %v1107, %v1110
      %vm1112 = vweird.f32 %v1076
      %vm1113 = vweird.f32 %v1107
      %vm1114 = vmor %vm1112, %vm1113
      %v1115 = vsel %vm1114, %v1107, %v1111
      %v1116 = vand.u32 2147483647, %v1076
      %vm1117 = vcmp.eq.f32.partialorder %v1116, 8.507059e+37
      %v1118 = vand.u32 %v1076, 2147483648
      %v1119 = vor.u32 1.1754944e-38, %v1118
      %v1120 = vsel %vm1117, %v1119, %v1115
      %v1121 = vmul.f32 %v1067, %v1120
      %1122 = vrot.lane.b32.xlu0 %v774, 56
      %v1123 = vpop.permute.xlu0 %1122
      %1124 = vrot.lane.b32.xlu0 %v777, 56
      %v1125 = vpop.permute.xlu0 %1124
      %1126 = vrot.lane.b32.xlu0 %v780, 56
      %v1127 = vpop.permute.xlu0 %1126
      %v1132 = vsel %vm841, %v1091, 0
      %v1135 = vsel %vm841, %v1106, 0
      %v1138 = vsel %vm841, %v1121, 0
      %1140 = vmatpush.msra.mxu0 0.0
      %1141 = vmatpush.msra.mxu0 0.0
      %1142 = vmatpush.msra.mxu0 0.0
      %1143 = vmatpush.msra.mxu0 0.0
      %1144 = vmatpush.msra.mxu0 0.0
      %1145 = vmatpush.msra.mxu0 0.0
      %1146 = vmatpush.msra.mxu0 0.0
      %1147 = vmatpush.msra.mxu0 0.0
      %1148 = vmatpush.msra.mxu0 0.0
      %1149 = vmatpush.msra.mxu0 0.0
      %1150 = vmatpush.msra.mxu0 0.0
      %1151 = vmatpush.msra.mxu0 0.0
      %1152 = vmatpush.msra.mxu0 0.0
      %1153 = vmatpush.msra.mxu0 %v1127
      %1154 = vmatpush.msra.mxu0 %v1125
      %1155 = vmatpush.msra.mxu0 %v1123
      %1156 = vmatmul.f32.gmra.mxu0 %v1132
      %v1157 = vpop.f32.mrf.mxu0
      %v1158 = vadd.f32 0.0, %v1157
      %1159 = vmatmul.f32.gmra.mxu0 %v1135
      %v1160 = vpop.f32.mrf.mxu0
      %v1161 = vadd.f32 0.0, %v1160
      %1162 = vmatmul.f32.gmra.mxu0 %v1138
      %v1163 = vpop.f32.mrf.mxu0
      %v1164 = vadd.f32 0.0, %v1163
      %1165 = vdwg.mxu0
      %v1166 = vld [vmem:[%s608 + $0x8] sm:$0xff]
      %v1168 = vsel %vm799, %v1158, 0
      %v1171 = vsel %vm799, %v1161, 0
      %v1174 = vsel %vm799, %v1164, 0
      %1176 = vmatpush.msra.mxu0 0.0
      %1177 = vmatpush.msra.mxu0 0.0
      %1178 = vmatpush.msra.mxu0 0.0
      %1179 = vmatpush.msra.mxu0 0.0
      %1180 = vmatpush.msra.mxu0 0.0
      %1181 = vmatpush.msra.mxu0 0.0
      %1182 = vmatpush.msra.mxu0 0.0
      %1183 = vmatpush.msra.mxu0 0.0
      %1184 = vmatpush.msra.mxu0 0.0
      %1185 = vmatpush.msra.mxu0 0.0
      %1186 = vmatpush.msra.mxu0 0.0
      %1187 = vmatpush.msra.mxu0 0.0
      %1188 = vmatpush.msra.mxu0 0.0
      %1189 = vmatpush.msra.mxu0 0.0
      %1190 = vmatpush.msra.mxu0 0.0
      %1191 = vmatpush.msra.mxu0 %v1166
      %1192 = vmatmul.f32.gmra.mxu0 %v1168
      %v1193 = vpop.f32.mrf.mxu0
      %v1194 = vadd.f32 0.0, %v1193
      %1195 = vmatmul.f32.gmra.mxu0 %v1171
      %v1196 = vpop.f32.mrf.mxu0
      %v1197 = vadd.f32 0.0, %v1196
      %1198 = vmatmul.f32.gmra.mxu0 %v1174
      %v1199 = vpop.f32.mrf.mxu0
      %v1200 = vadd.f32 0.0, %v1199
      %1201 = vdwg.mxu0
      %v1202 = vadd.f32 %v994, %v1194
      %v1203 = vadd.f32 %v995, %v1197
      %v1204 = vadd.f32 %v996, %v1200
      %1205 = vrot.lane.b32.xlu0 %v774, 112
      %v1206 = vpop.permute.xlu0 %1205
      %1207 = vrot.lane.b32.xlu0 %v777, 112
      %v1208 = vpop.permute.xlu0 %1207
      %1209 = vrot.lane.b32.xlu0 %v780, 112
      %v1210 = vpop.permute.xlu0 %1209
      %1211 = vrot.lane.b32.xlu0 %v774, 80
      %v1212 = vpop.permute.xlu0 %1211
      %1213 = vrot.lane.b32.xlu0 %v777, 80
      %v1214 = vpop.permute.xlu0 %1213
      %1215 = vrot.lane.b32.xlu0 %v780, 80
      %v1216 = vpop.permute.xlu0 %1215
      %v1217 = vsel %vm799, %v1206, 0
      %v1219 = vsel %vm799, %v1208, 0
      %v1221 = vsel %vm799, %v1210, 0
      %v1223 = vsel %vm799, %v1212, 0
      %v1225 = vsel %vm799, %v1214, 0
      %v1227 = vsel %vm799, %v1216, 0
      %1229 = vmatpush.xpose.msra.mxu0 0.0
      %1230 = vmatpush.xpose.msra.mxu0 0.0
      %1231 = vmatpush.xpose.msra.mxu0 0.0
      %1232 = vmatpush.xpose.msra.mxu0 0.0
      %1233 = vmatpush.xpose.msra.mxu0 0.0
      %1234 = vmatpush.xpose.msra.mxu0 0.0
      %1235 = vmatpush.xpose.msra.mxu0 0.0
      %1236 = vmatpush.xpose.msra.mxu0 0.0
      %1237 = vmatpush.xpose.msra.mxu0 0.0
      %1238 = vmatpush.xpose.msra.mxu0 0.0
      %1239 = vmatpush.xpose.msra.mxu0 0.0
      %1240 = vmatpush.xpose.msra.mxu0 0.0
      %1241 = vmatpush.xpose.msra.mxu0 0.0
      %1242 = vmatpush.xpose.msra.mxu0 %v1227
      %1243 = vmatpush.xpose.msra.mxu0 %v1225
      %1244 = vmatpush.xpose.msra.mxu0 %v1223
      %1245 = vmatmul.f32.gmra.mxu0 %v1217
      %v1246 = vpop.f32.mrf.mxu0
      %v1247 = vadd.f32 0.0, %v1246
      %1248 = vmatmul.f32.gmra.mxu0 %v1219
      %v1249 = vpop.f32.mrf.mxu0
      %v1250 = vadd.f32 0.0, %v1249
      %1251 = vmatmul.f32.gmra.mxu0 %v1221
      %v1252 = vpop.f32.mrf.mxu0
      %v1253 = vadd.f32 0.0, %v1252
      %1254 = vdwg.mxu0
      %v1255 = vsel %vm782, %v1247, -1e+30
      %v1256 = vsel %vm782, %v1250, -1e+30
      %v1257 = vsel %vm782, %v1253, -1e+30
      %v1258 = vsel %vm841, %v1255, -inf
      %1259 = vmax.xlane.f32.xlu0 %v1258
      %v1260 = vpop.xlane.xlu0 %1259
      %v1261 = vsel %vm841, %v1256, -inf
      %1262 = vmax.xlane.f32.xlu0 %v1261
      %v1263 = vpop.xlane.xlu0 %1262
      %v1264 = vsel %vm841, %v1257, -inf
      %1265 = vmax.xlane.f32.xlu0 %v1264
      %v1266 = vpop.xlane.xlu0 %1265
      %v1267 = vsub.f32 %v1255, %v1260
      %v1268 = vsub.f32 %v1256, %v1263
      %v1269 = vsub.f32 %v1257, %v1266
      %v1270 = vmul.f32 %v1267, 1.442695
      %v1271 = vpow.pop %v1270
      %v1272 = vmul.f32 %v1268, 1.442695
      %v1273 = vpow.pop %v1272
      %v1274 = vmul.f32 %v1269, 1.442695
      %v1275 = vpow.pop %v1274
      %v1276 = vsel %vm841, %v1271, 0.0
      %1277 = vadd.xlane.f32.xlu0 %v1276
      %v1278 = vpop.xlane.xlu0 %1277
      %v1279 = vsel %vm841, %v1273, 0.0
      %1280 = vadd.xlane.f32.xlu0 %v1279
      %v1281 = vpop.xlane.xlu0 %1280
      %v1282 = vsel %vm841, %v1275, 0.0
      %1283 = vadd.xlane.f32.xlu0 %v1282
      %v1284 = vpop.xlane.xlu0 %1283
      %v1285 = vrcp.pop %v1278
      %v1286 = vmul.f32 %v1278, %v1285
      %v1287 = vsub.f32 1.0, %v1286
      %v1288 = vmul.f32 %v1285, %v1287
      %v1289 = vadd.f32 %v1285, %v1288
      %vm1290 = vweird.f32 %v1278
      %vm1291 = vweird.f32 %v1285
      %vm1292 = vmor %vm1290, %vm1291
      %v1293 = vsel %vm1292, %v1285, %v1289
      %v1294 = vand.u32 2147483647, %v1278
      %vm1295 = vcmp.eq.f32.partialorder %v1294, 8.507059e+37
      %v1296 = vand.u32 %v1278, 2147483648
      %v1297 = vor.u32 1.1754944e-38, %v1296
      %v1298 = vsel %vm1295, %v1297, %v1293
      %v1299 = vmul.f32 %v1271, %v1298
      %v1300 = vrcp.pop %v1281
      %v1301 = vmul.f32 %v1281, %v1300
      %v1302 = vsub.f32 1.0, %v1301
      %v1303 = vmul.f32 %v1300, %v1302
      %v1304 = vadd.f32 %v1300, %v1303
      %vm1305 = vweird.f32 %v1281
      %vm1306 = vweird.f32 %v1300
      %vm1307 = vmor %vm1305, %vm1306
      %v1308 = vsel %vm1307, %v1300, %v1304
      %v1309 = vand.u32 2147483647, %v1281
      %vm1310 = vcmp.eq.f32.partialorder %v1309, 8.507059e+37
      %v1311 = vand.u32 %v1281, 2147483648
      %v1312 = vor.u32 1.1754944e-38, %v1311
      %v1313 = vsel %vm1310, %v1312, %v1308
      %v1314 = vmul.f32 %v1273, %v1313
      %v1315 = vrcp.pop %v1284
      %v1316 = vmul.f32 %v1284, %v1315
      %v1317 = vsub.f32 1.0, %v1316
      %v1318 = vmul.f32 %v1315, %v1317
      %v1319 = vadd.f32 %v1315, %v1318
      %vm1320 = vweird.f32 %v1284
      %vm1321 = vweird.f32 %v1315
      %vm1322 = vmor %vm1320, %vm1321
      %v1323 = vsel %vm1322, %v1315, %v1319
      %v1324 = vand.u32 2147483647, %v1284
      %vm1325 = vcmp.eq.f32.partialorder %v1324, 8.507059e+37
      %v1326 = vand.u32 %v1284, 2147483648
      %v1327 = vor.u32 1.1754944e-38, %v1326
      %v1328 = vsel %vm1325, %v1327, %v1323
      %v1329 = vmul.f32 %v1275, %v1328
      %1330 = vrot.lane.b32.xlu0 %v774, 48
      %v1331 = vpop.permute.xlu0 %1330
      %1332 = vrot.lane.b32.xlu0 %v777, 48
      %v1333 = vpop.permute.xlu0 %1332
      %1334 = vrot.lane.b32.xlu0 %v780, 48
      %v1335 = vpop.permute.xlu0 %1334
      %v1340 = vsel %vm841, %v1299, 0
      %v1343 = vsel %vm841, %v1314, 0
      %v1346 = vsel %vm841, %v1329, 0
      %1348 = vmatpush.msra.mxu0 0.0
      %1349 = vmatpush.msra.mxu0 0.0
      %1350 = vmatpush.msra.mxu0 0.0
      %1351 = vmatpush.msra.mxu0 0.0
      %1352 = vmatpush.msra.mxu0 0.0
      %1353 = vmatpush.msra.mxu0 0.0
      %1354 = vmatpush.msra.mxu0 0.0
      %1355 = vmatpush.msra.mxu0 0.0
      %1356 = vmatpush.msra.mxu0 0.0
      %1357 = vmatpush.msra.mxu0 0.0
      %1358 = vmatpush.msra.mxu0 0.0
      %1359 = vmatpush.msra.mxu0 0.0
      %1360 = vmatpush.msra.mxu0 0.0
      %1361 = vmatpush.msra.mxu0 %v1335
      %1362 = vmatpush.msra.mxu0 %v1333
      %1363 = vmatpush.msra.mxu0 %v1331
      %1364 = vmatmul.f32.gmra.mxu0 %v1340
      %v1365 = vpop.f32.mrf.mxu0
      %v1366 = vadd.f32 0.0, %v1365
      %1367 = vmatmul.f32.gmra.mxu0 %v1343
      %v1368 = vpop.f32.mrf.mxu0
      %v1369 = vadd.f32 0.0, %v1368
      %1370 = vmatmul.f32.gmra.mxu0 %v1346
      %v1371 = vpop.f32.mrf.mxu0
      %v1372 = vadd.f32 0.0, %v1371
      %1373 = vdwg.mxu0
      %v1374 = vld [vmem:[%s608 + $0x10] sm:$0xff]
      %v1376 = vsel %vm799, %v1366, 0
      %v1379 = vsel %vm799, %v1369, 0
      %v1382 = vsel %vm799, %v1372, 0
      %1384 = vmatpush.msra.mxu0 0.0
      %1385 = vmatpush.msra.mxu0 0.0
      %1386 = vmatpush.msra.mxu0 0.0
      %1387 = vmatpush.msra.mxu0 0.0
      %1388 = vmatpush.msra.mxu0 0.0
      %1389 = vmatpush.msra.mxu0 0.0
      %1390 = vmatpush.msra.mxu0 0.0
      %1391 = vmatpush.msra.mxu0 0.0
      %1392 = vmatpush.msra.mxu0 0.0
      %1393 = vmatpush.msra.mxu0 0.0
      %1394 = vmatpush.msra.mxu0 0.0
      %1395 = vmatpush.msra.mxu0 0.0
      %1396 = vmatpush.msra.mxu0 0.0
      %1397 = vmatpush.msra.mxu0 0.0
      %1398 = vmatpush.msra.mxu0 0.0
      %1399 = vmatpush.msra.mxu0 %v1374
      %1400 = vmatmul.f32.gmra.mxu0 %v1376
      %v1401 = vpop.f32.mrf.mxu0
      %v1402 = vadd.f32 0.0, %v1401
      %1403 = vmatmul.f32.gmra.mxu0 %v1379
      %v1404 = vpop.f32.mrf.mxu0
      %v1405 = vadd.f32 0.0, %v1404
      %1406 = vmatmul.f32.gmra.mxu0 %v1382
      %v1407 = vpop.f32.mrf.mxu0
      %v1408 = vadd.f32 0.0, %v1407
      %1409 = vdwg.mxu0
      %v1410 = vadd.f32 %v1202, %v1402
      %v1411 = vadd.f32 %v1203, %v1405
      %v1412 = vadd.f32 %v1204, %v1408
      %1413 = vrot.lane.b32.xlu0 %v774, 104
      %v1414 = vpop.permute.xlu0 %1413
      %1415 = vrot.lane.b32.xlu0 %v777, 104
      %v1416 = vpop.permute.xlu0 %1415
      %1417 = vrot.lane.b32.xlu0 %v780, 104
      %v1418 = vpop.permute.xlu0 %1417
      %1419 = vrot.lane.b32.xlu0 %v774, 72
      %v1420 = vpop.permute.xlu0 %1419
      %1421 = vrot.lane.b32.xlu0 %v777, 72
      %v1422 = vpop.permute.xlu0 %1421
      %1423 = vrot.lane.b32.xlu0 %v780, 72
      %v1424 = vpop.permute.xlu0 %1423
      %v1425 = vsel %vm799, %v1414, 0
      %v1427 = vsel %vm799, %v1416, 0
      %v1429 = vsel %vm799, %v1418, 0
      %v1431 = vsel %vm799, %v1420, 0
      %v1433 = vsel %vm799, %v1422, 0
      %v1435 = vsel %vm799, %v1424, 0
      %1437 = vmatpush.xpose.msra.mxu0 0.0
      %1438 = vmatpush.xpose.msra.mxu0 0.0
      %1439 = vmatpush.xpose.msra.mxu0 0.0
      %1440 = vmatpush.xpose.msra.mxu0 0.0
      %1441 = vmatpush.xpose.msra.mxu0 0.0
      %1442 = vmatpush.xpose.msra.mxu0 0.0
      %1443 = vmatpush.xpose.msra.mxu0 0.0
      %1444 = vmatpush.xpose.msra.mxu0 0.0
      %1445 = vmatpush.xpose.msra.mxu0 0.0
      %1446 = vmatpush.xpose.msra.mxu0 0.0
      %1447 = vmatpush.xpose.msra.mxu0 0.0
      %1448 = vmatpush.xpose.msra.mxu0 0.0
      %1449 = vmatpush.xpose.msra.mxu0 0.0
      %1450 = vmatpush.xpose.msra.mxu0 %v1435
      %1451 = vmatpush.xpose.msra.mxu0 %v1433
      %1452 = vmatpush.xpose.msra.mxu0 %v1431
      %1453 = vmatmul.f32.gmra.mxu0 %v1425
      %v1454 = vpop.f32.mrf.mxu0
      %v1455 = vadd.f32 0.0, %v1454
      %1456 = vmatmul.f32.gmra.mxu0 %v1427
      %v1457 = vpop.f32.mrf.mxu0
      %v1458 = vadd.f32 0.0, %v1457
      %1459 = vmatmul.f32.gmra.mxu0 %v1429
      %v1460 = vpop.f32.mrf.mxu0
      %v1461 = vadd.f32 0.0, %v1460
      %1462 = vdwg.mxu0
      %v1463 = vsel %vm782, %v1455, -1e+30
      %v1464 = vsel %vm782, %v1458, -1e+30
      %v1465 = vsel %vm782, %v1461, -1e+30
      %v1466 = vsel %vm841, %v1463, -inf
      %1467 = vmax.xlane.f32.xlu0 %v1466
      %v1468 = vpop.xlane.xlu0 %1467
      %v1469 = vsel %vm841, %v1464, -inf
      %1470 = vmax.xlane.f32.xlu0 %v1469
      %v1471 = vpop.xlane.xlu0 %1470
      %v1472 = vsel %vm841, %v1465, -inf
      %1473 = vmax.xlane.f32.xlu0 %v1472
      %v1474 = vpop.xlane.xlu0 %1473
      %v1475 = vsub.f32 %v1463, %v1468
      %v1476 = vsub.f32 %v1464, %v1471
      %v1477 = vsub.f32 %v1465, %v1474
      %v1478 = vmul.f32 %v1475, 1.442695
      %v1479 = vpow.pop %v1478
      %v1480 = vmul.f32 %v1476, 1.442695
      %v1481 = vpow.pop %v1480
      %v1482 = vmul.f32 %v1477, 1.442695
      %v1483 = vpow.pop %v1482
      %v1484 = vsel %vm841, %v1479, 0.0
      %1485 = vadd.xlane.f32.xlu0 %v1484
      %v1486 = vpop.xlane.xlu0 %1485
      %v1487 = vsel %vm841, %v1481, 0.0
      %1488 = vadd.xlane.f32.xlu0 %v1487
      %v1489 = vpop.xlane.xlu0 %1488
      %v1490 = vsel %vm841, %v1483, 0.0
      %1491 = vadd.xlane.f32.xlu0 %v1490
      %v1492 = vpop.xlane.xlu0 %1491
      %v1493 = vrcp.pop %v1486
      %v1494 = vmul.f32 %v1486, %v1493
      %v1495 = vsub.f32 1.0, %v1494
      %v1496 = vmul.f32 %v1493, %v1495
      %v1497 = vadd.f32 %v1493, %v1496
      %vm1498 = vweird.f32 %v1486
      %vm1499 = vweird.f32 %v1493
      %vm1500 = vmor %vm1498, %vm1499
      %v1501 = vsel %vm1500, %v1493, %v1497
      %v1502 = vand.u32 2147483647, %v1486
      %vm1503 = vcmp.eq.f32.partialorder %v1502, 8.507059e+37
      %v1504 = vand.u32 %v1486, 2147483648
      %v1505 = vor.u32 1.1754944e-38, %v1504
      %v1506 = vsel %vm1503, %v1505, %v1501
      %v1507 = vmul.f32 %v1479, %v1506
      %v1508 = vrcp.pop %v1489
      %v1509 = vmul.f32 %v1489, %v1508
      %v1510 = vsub.f32 1.0, %v1509
      %v1511 = vmul.f32 %v1508, %v1510
      %v1512 = vadd.f32 %v1508, %v1511
      %vm1513 = vweird.f32 %v1489
      %vm1514 = vweird.f32 %v1508
      %vm1515 = vmor %vm1513, %vm1514
      %v1516 = vsel %vm1515, %v1508, %v1512
      %v1517 = vand.u32 2147483647, %v1489
      %vm1518 = vcmp.eq.f32.partialorder %v1517, 8.507059e+37
      %v1519 = vand.u32 %v1489, 2147483648
      %v1520 = vor.u32 1.1754944e-38, %v1519
      %v1521 = vsel %vm1518, %v1520, %v1516
      %v1522 = vmul.f32 %v1481, %v1521
      %v1523 = vrcp.pop %v1492
      %v1524 = vmul.f32 %v1492, %v1523
      %v1525 = vsub.f32 1.0, %v1524
      %v1526 = vmul.f32 %v1523, %v1525
      %v1527 = vadd.f32 %v1523, %v1526
      %vm1528 = vweird.f32 %v1492
      %vm1529 = vweird.f32 %v1523
      %vm1530 = vmor %vm1528, %vm1529
      %v1531 = vsel %vm1530, %v1523, %v1527
      %v1532 = vand.u32 2147483647, %v1492
      %vm1533 = vcmp.eq.f32.partialorder %v1532, 8.507059e+37
      %v1534 = vand.u32 %v1492, 2147483648
      %v1535 = vor.u32 1.1754944e-38, %v1534
      %v1536 = vsel %vm1533, %v1535, %v1531
      %v1537 = vmul.f32 %v1483, %v1536
      %1538 = vrot.lane.b32.xlu0 %v774, 40
      %v1539 = vpop.permute.xlu0 %1538
      %1540 = vrot.lane.b32.xlu0 %v777, 40
      %v1541 = vpop.permute.xlu0 %1540
      %1542 = vrot.lane.b32.xlu0 %v780, 40
      %v1543 = vpop.permute.xlu0 %1542
      %v1548 = vsel %vm841, %v1507, 0
      %v1551 = vsel %vm841, %v1522, 0
      %v1554 = vsel %vm841, %v1537, 0
      %1556 = vmatpush.msra.mxu0 0.0
      %1557 = vmatpush.msra.mxu0 0.0
      %1558 = vmatpush.msra.mxu0 0.0
      %1559 = vmatpush.msra.mxu0 0.0
      %1560 = vmatpush.msra.mxu0 0.0
      %1561 = vmatpush.msra.mxu0 0.0
      %1562 = vmatpush.msra.mxu0 0.0
      %1563 = vmatpush.msra.mxu0 0.0
      %1564 = vmatpush.msra.mxu0 0.0
      %1565 = vmatpush.msra.mxu0 0.0
      %1566 = vmatpush.msra.mxu0 0.0
      %1567 = vmatpush.msra.mxu0 0.0
      %1568 = vmatpush.msra.mxu0 0.0
      %1569 = vmatpush.msra.mxu0 %v1543
      %1570 = vmatpush.msra.mxu0 %v1541
      %1571 = vmatpush.msra.mxu0 %v1539
      %1572 = vmatmul.f32.gmra.mxu0 %v1548
      %v1573 = vpop.f32.mrf.mxu0
      %v1574 = vadd.f32 0.0, %v1573
      %1575 = vmatmul.f32.gmra.mxu0 %v1551
      %v1576 = vpop.f32.mrf.mxu0
      %v1577 = vadd.f32 0.0, %v1576
      %1578 = vmatmul.f32.gmra.mxu0 %v1554
      %v1579 = vpop.f32.mrf.mxu0
      %v1580 = vadd.f32 0.0, %v1579
      %1581 = vdwg.mxu0
      %v1582 = vld [vmem:[%s608 + $0x18] sm:$0xff]
      %v1584 = vsel %vm799, %v1574, 0
      %v1587 = vsel %vm799, %v1577, 0
      %v1590 = vsel %vm799, %v1580, 0
      %1592 = vmatpush.msra.mxu0 0.0
      %1593 = vmatpush.msra.mxu0 0.0
      %1594 = vmatpush.msra.mxu0 0.0
      %1595 = vmatpush.msra.mxu0 0.0
      %1596 = vmatpush.msra.mxu0 0.0
      %1597 = vmatpush.msra.mxu0 0.0
      %1598 = vmatpush.msra.mxu0 0.0
      %1599 = vmatpush.msra.mxu0 0.0
      %1600 = vmatpush.msra.mxu0 0.0
      %1601 = vmatpush.msra.mxu0 0.0
      %1602 = vmatpush.msra.mxu0 0.0
      %1603 = vmatpush.msra.mxu0 0.0
      %1604 = vmatpush.msra.mxu0 0.0
      %1605 = vmatpush.msra.mxu0 0.0
      %1606 = vmatpush.msra.mxu0 0.0
      %1607 = vmatpush.msra.mxu0 %v1582
      %1608 = vmatmul.f32.gmra.mxu0 %v1584
      %v1609 = vpop.f32.mrf.mxu0
      %v1610 = vadd.f32 0.0, %v1609
      %1611 = vmatmul.f32.gmra.mxu0 %v1587
      %v1612 = vpop.f32.mrf.mxu0
      %v1613 = vadd.f32 0.0, %v1612
      %1614 = vmatmul.f32.gmra.mxu0 %v1590
      %v1615 = vpop.f32.mrf.mxu0
      %v1616 = vadd.f32 0.0, %v1615
      %1617 = vdwg.mxu0
      %v1618 = vadd.f32 %v1410, %v1610
      %v1619 = vadd.f32 %v1411, %v1613
      %v1620 = vadd.f32 %v1412, %v1616
      %v1621 = vld [vmem:[%s615] sm:$0x3]
      %1622 = vadd.xlane.f32.xlu0 %v1618
      %v1623 = vpop.xlane.xlu0 %1622
      %1624 = vadd.xlane.f32.xlu0 %v1619
      %v1625 = vpop.xlane.xlu0 %1624
      %1626 = vadd.xlane.f32.xlu0 %v1620
      %v1627 = vpop.xlane.xlu0 %1626
      %v1628 = vmul.f32 %v1623, 0.03125
      %v1629 = vmul.f32 %v1625, 0.03125
      %v1630 = vmul.f32 %v1627, 0.03125
      %v1631 = vsub.f32 %v1618, %v1628
      %v1632 = vsub.f32 %v1619, %v1629
      %v1633 = vsub.f32 %v1620, %v1630
      %v1634 = vmul.f32 %v1631, %v663
      %v1635 = vmul.f32 %v1632, %v663
      %v1636 = vmul.f32 %v1633, %v663
      %v1637 = vmul.f32 %v1634, %v1634
      %v1638 = vmul.f32 %v1635, %v1635
      %v1639 = vmul.f32 %v1636, %v1636
      %1640 = vadd.xlane.f32.xlu0 %v1637
      %v1641 = vpop.xlane.xlu0 %1640
      %1642 = vadd.xlane.f32.xlu0 %v1638
      %v1643 = vpop.xlane.xlu0 %1642
      %1644 = vadd.xlane.f32.xlu0 %v1639
      %v1645 = vpop.xlane.xlu0 %1644
      %v1646 = vmul.f32 %v1641, 0.03125
      %v1647 = vmul.f32 %v1643, 0.03125
      %v1648 = vmul.f32 %v1645, 0.03125
      %v1649 = vadd.f32 %v1646, 1e-12
      %v1650 = vadd.f32 %v1647, 1e-12
      %v1651 = vadd.f32 %v1648, 1e-12
      %v1652 = vrsqrt.pop %v1649
      %v1653 = vmul.f32 %v1652, %v1649
      %v1654 = vmul.f32 %v1653, %v1652
      %v1655 = vmul.f32 0.5, %v1654
      %v1656 = vsub.f32 1.5, %v1655
      %v1657 = vmul.f32 %v1652, %v1656
      %vm1658 = vweird.f32 %v1649
      %vm1659 = vweird.f32 %v1652
      %vm1660 = vmor %vm1658, %vm1659
      %v1661 = vsel %vm1660, %v1652, %v1657
      %v1662 = vrsqrt.pop %v1650
      %v1663 = vmul.f32 %v1662, %v1650
      %v1664 = vmul.f32 %v1663, %v1662
      %v1665 = vmul.f32 0.5, %v1664
      %v1666 = vsub.f32 1.5, %v1665
      %v1667 = vmul.f32 %v1662, %v1666
      %vm1668 = vweird.f32 %v1650
      %vm1669 = vweird.f32 %v1662
      %vm1670 = vmor %vm1668, %vm1669
      %v1671 = vsel %vm1670, %v1662, %v1667
      %v1672 = vrsqrt.pop %v1651
      %v1673 = vmul.f32 %v1672, %v1651
      %v1674 = vmul.f32 %v1673, %v1672
      %v1675 = vmul.f32 0.5, %v1674
      %v1676 = vsub.f32 1.5, %v1675
      %v1677 = vmul.f32 %v1672, %v1676
      %vm1678 = vweird.f32 %v1651
      %vm1679 = vweird.f32 %v1672
      %vm1680 = vmor %vm1678, %vm1679
      %v1681 = vsel %vm1680, %v1672, %v1677
      %v1682 = vmul.f32 %v1631, %v1661
      %v1683 = vmul.f32 %v1632, %v1671
      %v1684 = vmul.f32 %v1633, %v1681
      %v1685 = vperm.slane %v1621, 0
      %v1686 = vmul.f32 %v1682, %v1685
      %v1687 = vmul.f32 %v1683, %v1685
      %v1688 = vmul.f32 %v1684, %v1685
      %v1689 = vperm.slane %v1621, 1
      %v1690 = vadd.f32 %v1686, %v1689
      %v1691 = vadd.f32 %v1687, %v1689
      %v1692 = vadd.f32 %v1688, %v1689
      %v1693 = vld [vmem:[%s620] sm:$0xff]
      %v1694 = vld [vmem:[%s620 + $0x8] sm:$0xff]
      %v1695 = vld [vmem:[%s620 + $0x10] sm:$0xff]
      %v1696 = vld [vmem:[%s620 + $0x18] sm:$0xff]
      %v1697 = vld [vmem:[%s620 + $0x20] sm:$0xff]
      %v1698 = vld [vmem:[%s620 + $0x28] sm:$0xff]
      %v1699 = vld [vmem:[%s620 + $0x30] sm:$0xff]
      %v1700 = vld [vmem:[%s620 + $0x38] sm:$0xff]
      %v1701 = vld [vmem:[%s620 + $0x40] sm:$0xff]
      %v1702 = vld [vmem:[%s620 + $0x48] sm:$0xff]
      %v1703 = vld [vmem:[%s620 + $0x50] sm:$0xff]
      %v1704 = vld [vmem:[%s620 + $0x58] sm:$0xff]
      %v1705 = vld [vmem:[%s620 + $0x60] sm:$0xff]
      %v1706 = vld [vmem:[%s620 + $0x68] sm:$0xff]
      %v1707 = vld [vmem:[%s620 + $0x70] sm:$0xff]
      %v1708 = vld [vmem:[%s620 + $0x78] sm:$0xff]
      %v1709 = vld [vmem:[%s623] sm:$0x1]
      %v1711 = vperm.slane %v1709, 0
      %1713 = vmatpush.msra.mxu0 %v1708
      %1714 = vmatpush.msra.mxu0 %v1707
      %1715 = vmatpush.msra.mxu0 %v1706
      %1716 = vmatpush.msra.mxu0 %v1705
      %1717 = vmatpush.msra.mxu0 %v1704
      %1718 = vmatpush.msra.mxu0 %v1703
      %1719 = vmatpush.msra.mxu0 %v1702
      %1720 = vmatpush.msra.mxu0 %v1701
      %1721 = vmatpush.msra.mxu0 %v1700
      %1722 = vmatpush.msra.mxu0 %v1699
      %1723 = vmatpush.msra.mxu0 %v1698
      %1724 = vmatpush.msra.mxu0 %v1697
      %1725 = vmatpush.msra.mxu0 %v1696
      %1726 = vmatpush.msra.mxu0 %v1695
      %1727 = vmatpush.msra.mxu0 %v1694
      %1728 = vmatpush.msra.mxu0 %v1693
      %1729 = vmatmul.f32.gmra.mxu0 %v1690
      %v1730 = vpop.f32.mrf.mxu0
      %v1731 = vadd.f32 %v1711, %v1730
      %1732 = vmatmul.f32.gmra.mxu0 %v1691
      %v1733 = vpop.f32.mrf.mxu0
      %v1734 = vadd.f32 %v1711, %v1733
      %1735 = vmatmul.f32.gmra.mxu0 %v1692
      %v1736 = vpop.f32.mrf.mxu0
      %v1737 = vadd.f32 %v1711, %v1736
      %1738 = vdwg.mxu0
      %v1739 = vmul.f32 %v1731, 0.5
      %v1740 = vmul.f32 %v1734, 0.5
      %v1741 = vmul.f32 %v1737, 0.5
      %v1742 = vmul.f32 %v1731, 0.044715
      %v1743 = vmul.f32 %v1734, 0.044715
      %v1744 = vmul.f32 %v1737, 0.044715
      %v1745 = vmul.f32 %v1742, %v1731
      %v1746 = vmul.f32 %v1743, %v1734
      %v1747 = vmul.f32 %v1744, %v1737
      %v1748 = vmul.f32 %v1745, %v1731
      %v1749 = vmul.f32 %v1746, %v1734
      %v1750 = vmul.f32 %v1747, %v1737
      %v1751 = vadd.f32 %v1731, %v1748
      %v1752 = vadd.f32 %v1734, %v1749
      %v1753 = vadd.f32 %v1737, %v1750
      %v1754 = vmul.f32 %v1751, 0.7978846
      %v1755 = vmul.f32 %v1752, 0.7978846
      %v1756 = vmul.f32 %v1753, 0.7978846
      %v1757 = vtanh.pop %v1754
      %v1758 = vtanh.pop %v1755
      %v1759 = vtanh.pop %v1756
      %v1760 = vadd.f32 %v1757, 1.0
      %v1761 = vadd.f32 %v1758, 1.0
      %v1762 = vadd.f32 %v1759, 1.0
      %v1763 = vmul.f32 %v1739, %v1760
      %v1764 = vmul.f32 %v1740, %v1761
      %v1765 = vmul.f32 %v1741, %v1762
      %v1766 = vld [vmem:[%s628] sm:$0xff]
      %v1767 = vld [vmem:[%s628 + $0x8] sm:$0xff]
      %v1768 = vld [vmem:[%s628 + $0x10] sm:$0xff]
      %v1769 = vld [vmem:[%s628 + $0x18] sm:$0xff]
      %v1770 = vld [vmem:[%s628 + $0x20] sm:$0xff]
      %v1771 = vld [vmem:[%s628 + $0x28] sm:$0xff]
      %v1772 = vld [vmem:[%s628 + $0x30] sm:$0xff]
      %v1773 = vld [vmem:[%s628 + $0x38] sm:$0xff]
      %v1774 = vld [vmem:[%s628 + $0x40] sm:$0xff]
      %v1775 = vld [vmem:[%s628 + $0x48] sm:$0xff]
      %v1776 = vld [vmem:[%s628 + $0x50] sm:$0xff]
      %v1777 = vld [vmem:[%s628 + $0x58] sm:$0xff]
      %v1778 = vld [vmem:[%s628 + $0x60] sm:$0xff]
      %v1779 = vld [vmem:[%s628 + $0x68] sm:$0xff]
      %v1780 = vld [vmem:[%s628 + $0x70] sm:$0xff]
      %v1781 = vld [vmem:[%s628 + $0x78] sm:$0xff]
      %v1782 = vld [vmem:[%s631] sm:$0x1]
      %v1784 = vperm.slane %v1782, 0
      %1786 = vmatpush.msra.mxu0 %v1781
      %1787 = vmatpush.msra.mxu0 %v1780
      %1788 = vmatpush.msra.mxu0 %v1779
      %1789 = vmatpush.msra.mxu0 %v1778
      %1790 = vmatpush.msra.mxu0 %v1777
      %1791 = vmatpush.msra.mxu0 %v1776
      %1792 = vmatpush.msra.mxu0 %v1775
      %1793 = vmatpush.msra.mxu0 %v1774
      %1794 = vmatpush.msra.mxu0 %v1773
      %1795 = vmatpush.msra.mxu0 %v1772
      %1796 = vmatpush.msra.mxu0 %v1771
      %1797 = vmatpush.msra.mxu0 %v1770
      %1798 = vmatpush.msra.mxu0 %v1769
      %1799 = vmatpush.msra.mxu0 %v1768
      %1800 = vmatpush.msra.mxu0 %v1767
      %1801 = vmatpush.msra.mxu0 %v1766
      %1802 = vmatmul.f32.gmra.mxu0 %v1763
      %v1803 = vpop.f32.mrf.mxu0
      %v1804 = vadd.f32 %v1784, %v1803
      %1805 = vmatmul.f32.gmra.mxu0 %v1764
      %v1806 = vpop.f32.mrf.mxu0
      %v1807 = vadd.f32 %v1784, %v1806
      %1808 = vmatmul.f32.gmra.mxu0 %v1765
      %v1809 = vpop.f32.mrf.mxu0
      %v1810 = vadd.f32 %v1784, %v1809
      %1811 = vdwg.mxu0
      %v1812 = vadd.f32 %v1804, %v1618
      %v1813 = vadd.f32 %v1807, %v1619
      %v1814 = vadd.f32 %v1810, %v1620
      %1815 = vst [vmem:[#allocation2] sm:$0xff] %v1812
      %1816 = vst [vmem:[#allocation2 + $0x8] sm:$0xff] %v1813
      %1817 = vst [vmem:[#allocation2 + $0x10] sm:$0xff] %v1814
      %1818 = vst [vmem:[%s640] sm:$0xff] %v1812
      %1819 = vst [vmem:[%s640 + $0x8] sm:$0xff] %v1813
      %1820 = vst [vmem:[%s640 + $0x10] sm:$0xff] %v1814
      %p1821 = scmp.eq.s32.totalorder %s30, 1
      // Predicated region
      $region73: #{ast_forward.1} parent=67 // pred_check
        %p1822 = pneg %p1821
      $region74: #{ast_forward.1} parent=67 // pred_check_branch
        %1824 = sbr.rel (%p1822) target = $region76
      $region75: #{ast_forward.1} parent=67 // pred_region
        %v1825 = vld [vmem:[%s11] sm:$0x3]
        %1826 = vadd.xlane.f32.xlu0 %v1812
        %v1827 = vpop.xlane.xlu0 %1826
        %1828 = vadd.xlane.f32.xlu0 %v1813
        %v1829 = vpop.xlane.xlu0 %1828
        %1830 = vadd.xlane.f32.xlu0 %v1814
        %v1831 = vpop.xlane.xlu0 %1830
        %v1832 = vmul.f32 %v1827, 0.03125
        %v1833 = vmul.f32 %v1829, 0.03125
        %v1834 = vmul.f32 %v1831, 0.03125
        %v1835 = vsub.f32 %v1812, %v1832
        %v1836 = vsub.f32 %v1813, %v1833
        %v1837 = vsub.f32 %v1814, %v1834
        %v1838 = vmul.f32 %v1835, %v663
        %v1839 = vmul.f32 %v1836, %v663
        %v1840 = vmul.f32 %v1837, %v663
        %v1841 = vmul.f32 %v1838, %v1838
        %v1842 = vmul.f32 %v1839, %v1839
        %v1843 = vmul.f32 %v1840, %v1840
        %1844 = vadd.xlane.f32.xlu0 %v1841
        %v1845 = vpop.xlane.xlu0 %1844
        %1846 = vadd.xlane.f32.xlu0 %v1842
        %v1847 = vpop.xlane.xlu0 %1846
        %1848 = vadd.xlane.f32.xlu0 %v1843
        %v1849 = vpop.xlane.xlu0 %1848
        %v1850 = vmul.f32 %v1845, 0.03125
        %v1851 = vmul.f32 %v1847, 0.03125
        %v1852 = vmul.f32 %v1849, 0.03125
        %v1853 = vadd.f32 %v1850, 1e-12
        %v1854 = vadd.f32 %v1851, 1e-12
        %v1855 = vadd.f32 %v1852, 1e-12
        %v1856 = vrsqrt.pop %v1853
        %v1857 = vmul.f32 %v1856, %v1853
        %v1858 = vmul.f32 %v1857, %v1856
        %v1859 = vmul.f32 0.5, %v1858
        %v1860 = vsub.f32 1.5, %v1859
        %v1861 = vmul.f32 %v1856, %v1860
        %vm1862 = vweird.f32 %v1853
        %vm1863 = vweird.f32 %v1856
        %vm1864 = vmor %vm1862, %vm1863
        %v1865 = vsel %vm1864, %v1856, %v1861
        %v1866 = vrsqrt.pop %v1854
        %v1867 = vmul.f32 %v1866, %v1854
        %v1868 = vmul.f32 %v1867, %v1866
        %v1869 = vmul.f32 0.5, %v1868
        %v1870 = vsub.f32 1.5, %v1869
        %v1871 = vmul.f32 %v1866, %v1870
        %vm1872 = vweird.f32 %v1854
        %vm1873 = vweird.f32 %v1866
        %vm1874 = vmor %vm1872, %vm1873
        %v1875 = vsel %vm1874, %v1866, %v1871
        %v1876 = vrsqrt.pop %v1855
        %v1877 = vmul.f32 %v1876, %v1855
        %v1878 = vmul.f32 %v1877, %v1876
        %v1879 = vmul.f32 0.5, %v1878
        %v1880 = vsub.f32 1.5, %v1879
        %v1881 = vmul.f32 %v1876, %v1880
        %vm1882 = vweird.f32 %v1855
        %vm1883 = vweird.f32 %v1876
        %vm1884 = vmor %vm1882, %vm1883
        %v1885 = vsel %vm1884, %v1876, %v1881
        %v1886 = vmul.f32 %v1835, %v1865
        %v1887 = vmul.f32 %v1836, %v1875
        %v1888 = vmul.f32 %v1837, %v1885
        %v1889 = vperm.slane %v1825, 0
        %v1890 = vmul.f32 %v1886, %v1889
        %v1891 = vmul.f32 %v1887, %v1889
        %v1892 = vmul.f32 %v1888, %v1889
        %v1893 = vperm.slane %v1825, 1
        %v1894 = vadd.f32 %v1890, %v1893
        %v1895 = vadd.f32 %v1891, %v1893
        %v1896 = vadd.f32 %v1892, %v1893
        %1897 = vst [vmem:[%s645] sm:$0xff] %v1894
        %1898 = vst [vmem:[%s645 + $0x8] sm:$0xff] %v1895
        %1899 = vst [vmem:[%s645 + $0x10] sm:$0xff] %v1896
      $region76: #{ast_forward.1} parent=67 // pred_fallthru
        _
      %p1900 = scmp.lt.s32.totalorder %s30, 1
      %s1901 = scalar_select %p1900, %s30, 1
      %p1902 = scmp.lt.s32.totalorder %s29, 1
      %s1903 = scalar_select %p1902, %s29, 1
      %s1904 = smul.addr %s1903, 3
      %s1905 = smul.addr %s1901, 6
      %s1906 = sadd.s32 %s1904, %s1905
      %s1907 = smul.addr %s1906, 8
      %s1908 = scalar_lea.vmem %s12, %s1907
      %p1909 = scmp.lt.s32.totalorder %s29, 1
      %s1910 = scalar_select %p1909, %s29, 1
      %s1911 = smul.addr %s1910, 3
      %s1912 = smul.addr %s1911, 8
      %s1913 = scalar_lea.vmem %s13, %s1912
      // Predicated region
      $region77: #{ast_forward.1} parent=67 // pred_check
        %p1914 = pneg %p364
      $region78: #{ast_forward.1} parent=67 // pred_check_branch
        %1916 = sbr.rel (%p1914) target = $region80
      $region79: #{ast_forward.1} parent=67 // pred_region
        _
      $region80: #{ast_forward.1} parent=67 // pred_fallthru
        _
      // Predicated region
      $region81: #{ast_forward.1} parent=67 // pred_check
        %p1917 = pneg %p390
      $region82: #{ast_forward.1} parent=67 // pred_check_branch
        %1919 = sbr.rel (%p1917) target = $region84
      $region83: #{ast_forward.1} parent=67 // pred_region
        _
      $region84: #{ast_forward.1} parent=67 // pred_fallthru
        _
    $region68: #{ast_forward.1} parent=5 // pred_fallthru
      _
    %p1920 = scmp.le.s32.totalorder 2, %s20
    // Predicated region
    $region85: #{ast_forward.1} parent=5 // pred_check
      %p1921 = pneg %p1920
    $region86: #{ast_forward.1} parent=5 // pred_check_branch
      %1923 = sbr.rel (%p1921) target = $region88
    $region87: #{ast_forward.1} parent=5 // pred_region
      %s1924 = ssub.s32 %s20, 2
      // Predicated region
      $region89: #{ast_forward.1} parent=87 // pred_check
        %p1925 = pneg %p370
      $region90: #{ast_forward.1} parent=87 // pred_check_branch
        %1927 = sbr.rel (%p1925) target = $region92
      $region91: #{ast_forward.1} parent=87 // pred_region
        %p1928 = scmp.lt.s32.totalorder %s32, 1
        %s1929 = scalar_select %p1928, %s32, 1
        %p1930 = scmp.lt.s32.totalorder %s31, 1
        %s1931 = scalar_select %p1930, %s31, 1
        %s1932 = smul.addr %s1931, 3
        %s1933 = smul.addr %s1929, 6
        %s1934 = sadd.s32 %s1932, %s1933
        %s1935 = smul.addr %s1934, 8
        %s1936 = scalar_lea.vmem %s12, %s1935
      $region92: #{ast_forward.1} parent=87 // pred_fallthru
        _
      // Predicated region
      $region93: #{ast_forward.1} parent=87 // pred_check
        %p1937 = pneg %p396
      $region94: #{ast_forward.1} parent=87 // pred_check_branch
        %1939 = sbr.rel (%p1937) target = $region96
      $region95: #{ast_forward.1} parent=87 // pred_region
        %p1940 = scmp.lt.s32.totalorder %s31, 1
        %s1941 = scalar_select %p1940, %s31, 1
        %s1942 = smul.addr %s1941, 3
        %s1943 = smul.addr %s1942, 8
        %s1944 = scalar_lea.vmem %s13, %s1943
      $region96: #{ast_forward.1} parent=87 // pred_fallthru
        _
    $region88: #{ast_forward.1} parent=5 // pred_fallthru
      _
  $region6: #{ast_forward.1} parent=0 // loop_footer
    %s24 = sadd.s32 1, %s20
  $region7: #{ast_forward.1} parent=0 // loop_footer_branch
    %19 = sbr.rel target = $region3
  $region8: #{ast_forward.1} parent=0 // loop_exit
    _

</llo_original>
